<compile_context>
chip_gen: v5e
topology: v5e:2x2
jax: 0.10.0
libtpu: 0.0.40
codegen_flags: <defaults>
</compile_context>

<pallas_src>
import jax
import jax.numpy as jnp
from jax import lax
from jax.experimental import pallas as pl
from jax.experimental.pallas import tpu as pltpu

INPUT_SIZE = 60
HIDDEN_SIZE = 7
NUM_LAYERS = 2


def _round_up(n, m):
    return ((n + m - 1) // m) * m


# ---------------------------------------------------------------------------
# Pallas kernel: one batch block of the full 2-layer LSTM recurrence.
# ---------------------------------------------------------------------------
def lstm_extractor_kernel(x_ref, wih0_ref, whh0_ref, b0_ref,
                          wih1_ref, whh1_ref, b1_ref, out_ref, xg_ref):
    """Shapes (per batch block):
      x_ref   : (T, bb, D)   time-major input block
      wih0_ref: (D, 4H)      layer-0 input weights, gates stacked on lanes i|f|g|o
      whh0_ref: (H, 4H)      layer-0 recurrent weights
      b0_ref  : (1, 4H)      layer-0 combined bias (b_ih + b_hh)
      wih1_ref: (H, 4H)      layer-1 input weights
      whh1_ref: (H, 4H)      layer-1 recurrent weights
      b1_ref  : (1, 4H)      layer-1 combined bias
      out_ref : (bb, H)      last-timestep hidden state of the top layer
      xg_ref  : (T, bb, 4H)  VMEM scratch: precomputed layer-0 input projection
    """
    T, bb, D = x_ref.shape
    H = out_ref.shape[-1]
    G = 4 * H

    # ---- Hoisted layer-0 input projection (+ folded bias): one MXU matmul ----
    x_flat = x_ref[...].reshape(T * bb, D)
    xg = jnp.dot(x_flat, wih0_ref[...], preferred_element_type=jnp.float32)
    xg_ref[...] = (xg + b0_ref[...]).reshape(T, bb, G)

    whh0 = whh0_ref[...]
    wih1 = wih1_ref[...]
    whh1 = whh1_ref[...]
    b1 = b1_ref[...]

    def activate(gates, c):
        # PyTorch gate order along lanes: i | f | g | o
        i = jax.nn.sigmoid(gates[:, 0 * H:1 * H])
        f = jax.nn.sigmoid(gates[:, 1 * H:2 * H])
        g = jnp.tanh(gates[:, 2 * H:3 * H])
        o = jax.nn.sigmoid(gates[:, 3 * H:4 * H])
        c_new = f * c + i * g
        h_new = o * jnp.tanh(c_new)
        return h_new, c_new

    def step(t, carry):
        h0, c0, h1, c1 = carry
        # layer 0: only the recurrence matmul remains on the serial crit path.
        g0 = xg_ref[t] + jnp.dot(h0, whh0, preferred_element_type=jnp.float32)
        h0, c0 = activate(g0, c0)
        # layer 1: h1 @ whh1 is independent of this step's layer-0 output, so
        # two separate dots let the scheduler start it early.
        g1 = (jnp.dot(h0, wih1, preferred_element_type=jnp.float32)
              + jnp.dot(h1, whh1, preferred_element_type=jnp.float32)
              + b1)
        h1, c1 = activate(g1, c1)
        return (h0, c0, h1, c1)

    z = jnp.zeros((bb, H), jnp.float32)
    _, _, h1, _ = lax.fori_loop(0, T, step, (z, z, z, z), unroll=True)
    out_ref[...] = h1.astype(out_ref.dtype)


# ---------------------------------------------------------------------------
# Wrapper: gate-fused weight repack + batch-block grid pallas_call.
# ---------------------------------------------------------------------------
def lstm_extractor_forward(x, params, *, block_b=None):
    """x: (B, T, D) batch-first, like the PyTorch module. Returns (B, H) f32."""
    B, T, D = x.shape
    H = HIDDEN_SIZE
    G = 4 * H

    # Gate-fused weight repack: PyTorch (4H, in) -> (in, 4H), gate order i|f|g|o
    # preserved along the lane axis; biases combined once.
    wih0 = params["w_ih_l0"].T.astype(jnp.float32)                        # (D, 4H)
    whh0 = params["w_hh_l0"].T.astype(jnp.float32)                        # (H, 4H)
    b0 = (params["b_ih_l0"] + params["b_hh_l0"]).reshape(1, G).astype(jnp.float32)
    wih1 = params["w_ih_l1"].T.astype(jnp.float32)                        # (H, 4H)
    whh1 = params["w_hh_l1"].T.astype(jnp.float32)                        # (H, 4H)
    b1 = (params["b_ih_l1"] + params["b_hh_l1"]).reshape(1, G).astype(jnp.float32)

    # Batch block: multiple of 8 sublanes.  128 keeps the loop-carried state
    # within the vreg file while amortizing per-grid-step overhead; the
    # (T, bb, lane-padded) x block + scratch stay far below v7x's 64 MiB VMEM.
    if block_b is None:
        block_b = min(128, _round_up(B, 8))
    Bp = _round_up(B, block_b)

    x_tm = jnp.transpose(x, (1, 0, 2)).astype(jnp.float32)                # (T, B, D)
    if Bp != B:
        x_tm = jnp.pad(x_tm, ((0, 0), (0, Bp - B), (0, 0)))

    out = pl.pallas_call(
        lstm_extractor_kernel,
        out_shape=jax.ShapeDtypeStruct((Bp, H), jnp.float32),
        grid_spec=pltpu.PrefetchScalarGridSpec(
            num_scalar_prefetch=0,
            grid=(pl.cdiv(Bp, block_b),),
            in_specs=[
                pl.BlockSpec((T, block_b, D), lambda i: (0, i, 0)),
                pl.BlockSpec((D, G), lambda i: (0, 0)),
                pl.BlockSpec((H, G), lambda i: (0, 0)),
                pl.BlockSpec((1, G), lambda i: (0, 0)),
                pl.BlockSpec((H, G), lambda i: (0, 0)),
                pl.BlockSpec((H, G), lambda i: (0, 0)),
                pl.BlockSpec((1, G), lambda i: (0, 0)),
            ],
            out_specs=pl.BlockSpec((block_b, H), lambda i: (i, 0)),
            scratch_shapes=[pltpu.VMEM((T, block_b, G), jnp.float32)],
        ),
        compiler_params=pltpu.CompilerParams(
            dimension_semantics=("parallel",)),
    )(x_tm, wih0, whh0, b0, wih1, whh1, b1)
    return out[:B]


# ---------------------------------------------------------------------------
# Pure-JAX reference (PyTorch nn.LSTM semantics, eval mode) for verification.
# ---------------------------------------------------------------------------
def lstm_extractor_ref(x, params):
    B, T, D = x.shape
    H = HIDDEN_SIZE

    def cell(x_t, h, c, w_ih, w_hh, b_ih, b_hh):
        gates = x_t @ w_ih.T + h @ w_hh.T + b_ih + b_hh
        i, f, g, o = jnp.split(gates, 4, axis=-1)
        c = jax.nn.sigmoid(f) * c + jax.nn.sigmoid(i) * jnp.tanh(g)
        h = jax.nn.sigmoid(o) * jnp.tanh(c)
        return h, c

    z = jnp.zeros((B, H), jnp.float32)

    def step(carry, x_t):
        h0, c0, h1, c1 = carry
        h0, c0 = cell(x_t, h0, c0, params["w_ih_l0"], params["w_hh_l0"],
                      params["b_ih_l0"], params["b_hh_l0"])
        h1, c1 = cell(h0, h1, c1, params["w_ih_l1"], params["w_hh_l1"],
                      params["b_ih_l1"], params["b_hh_l1"])
        return (h0, c0, h1, c1), None

    (_, _, h1, _), _ = lax.scan(step, (z, z, z, z), jnp.transpose(x, (1, 0, 2)))
    return h1


# ---------------------------------------------------------------------------
def make_params(key):
    """Deterministic init matching PyTorch LSTM param shapes (U(-k, k), k=1/sqrt(H))."""
    H, D = HIDDEN_SIZE, INPUT_SIZE
    k = 1.0 / jnp.sqrt(jnp.float32(H))
    shapes = {
        "w_ih_l0": (4 * H, D), "w_hh_l0": (4 * H, H),
        "b_ih_l0": (4 * H,),   "b_hh_l0": (4 * H,),
        "w_ih_l1": (4 * H, H), "w_hh_l1": (4 * H, H),
        "b_ih_l1": (4 * H,),   "b_hh_l1": (4 * H,),
    }
    params = {}
    keys = jax.random.split(key, len(shapes))
    for sub, (name, shp) in zip(keys, sorted(shapes.items())):
        params[name] = jax.random.uniform(sub, shp, jnp.float32, -k, k)
    return params


if __name__ == "__main__":
    key = jax.random.PRNGKey(0)
    pkey, xkey = jax.random.split(key)
    params = make_params(pkey)

    B, T = 4, 8
    x = jax.random.normal(xkey, (B, T, INPUT_SIZE), jnp.float32)

    out = lstm_extractor_forward(x, params)
    out = jax.block_until_ready(out)

    ref = jax.block_until_ready(lstm_extractor_ref(x, params))
    assert out.shape == (B, HIDDEN_SIZE), out.shape
    assert jnp.allclose(out, ref, atol=1e-4, rtol=1e-4), (out, ref)

    print("KERNEL_OK")
</pallas_src>

<mosaic_0001>
module attributes {stable_mosaic.version = 11 : i64} {
  func.func @lstm_extractor_kernel(%arg0: i32, %arg1: memref<8x8x60xf32, #tpu.memory_space<vmem>>, %arg2: memref<60x28xf32, #tpu.memory_space<vmem>>, %arg3: memref<7x28xf32, #tpu.memory_space<vmem>>, %arg4: memref<1x28xf32, #tpu.memory_space<vmem>>, %arg5: memref<7x28xf32, #tpu.memory_space<vmem>>, %arg6: memref<7x28xf32, #tpu.memory_space<vmem>>, %arg7: memref<1x28xf32, #tpu.memory_space<vmem>>, %arg8: memref<8x7xf32, #tpu.memory_space<vmem>>, %arg9: memref<8x8x28xf32, #tpu.memory_space<vmem>>) attributes {dimension_semantics = [#tpu.dimension_semantics<parallel>], iteration_bounds = array<i64: 1>, scalar_prefetch = 0 : i64, scratch_operands = 1 : i64, tpu.core_type = #tpu.core_type<tc>, window_params = [{transform_indices = @transform_0, window_bounds = array<i64: 8, 8, 60>}, {pipeline_mode = #tpu.pipeline_mode<synchronous>, transform_indices = @transform_1, window_bounds = array<i64: 60, 28>}, {pipeline_mode = #tpu.pipeline_mode<synchronous>, transform_indices = @transform_2, window_bounds = array<i64: 7, 28>}, {pipeline_mode = #tpu.pipeline_mode<synchronous>, transform_indices = @transform_3, window_bounds = array<i64: 1, 28>}, {pipeline_mode = #tpu.pipeline_mode<synchronous>, transform_indices = @transform_4, window_bounds = array<i64: 7, 28>}, {pipeline_mode = #tpu.pipeline_mode<synchronous>, transform_indices = @transform_5, window_bounds = array<i64: 7, 28>}, {pipeline_mode = #tpu.pipeline_mode<synchronous>, transform_indices = @transform_6, window_bounds = array<i64: 1, 28>}, {transform_indices = @transform_7, window_bounds = array<i64: 8, 7>}]} {
    %c0 = arith.constant 0 : index
    %c0_0 = arith.constant 0 : index
    %c0_1 = arith.constant 0 : index
    %0 = vector.load %arg1[%c0, %c0_0, %c0_1] : memref<8x8x60xf32, #tpu.memory_space<vmem>>, vector<8x8x60xf32>
    %1 = vector.shape_cast %0 : vector<8x8x60xf32> to vector<64x60xf32>
    %c0_2 = arith.constant 0 : index
    %c0_3 = arith.constant 0 : index
    %2 = vector.load %arg2[%c0_2, %c0_3] : memref<60x28xf32, #tpu.memory_space<vmem>>, vector<60x28xf32>
    %cst = arith.constant dense<0.000000e+00> : vector<64x28xf32>
    %3 = tpu.matmul %1, %2, %cst {dimension_numbers = #tpu.dot_dimension_numbers<[1], [0], [0], [1], [0, 0, 1, 1], [], []>} : vector<64x60xf32>, vector<60x28xf32>, vector<64x28xf32> -> vector<64x28xf32>
    %c0_4 = arith.constant 0 : index
    %c0_5 = arith.constant 0 : index
    %4 = vector.load %arg4[%c0_4, %c0_5] : memref<1x28xf32, #tpu.memory_space<vmem>>, vector<1x28xf32>
    %5 = vector.broadcast %4 : vector<1x28xf32> to vector<64x28xf32>
    %6 = arith.addf %3, %5 : vector<64x28xf32>
    %7 = vector.shape_cast %6 : vector<64x28xf32> to vector<8x8x28xf32>
    %c0_6 = arith.constant 0 : index
    %c0_7 = arith.constant 0 : index
    %c0_8 = arith.constant 0 : index
    %8 = vector.load %arg9[%c0_6, %c0_7, %c0_8] : memref<8x8x28xf32, #tpu.memory_space<vmem>>, vector<8x8x28xf32>
    tpu.vector_store %arg9[%c0_6, %c0_7, %c0_8], %7 {strides = array<i32>} : memref<8x8x28xf32, #tpu.memory_space<vmem>>, vector<8x8x28xf32>,
    %c0_9 = arith.constant 0 : index
    %c0_10 = arith.constant 0 : index
    %9 = vector.load %arg3[%c0_9, %c0_10] : memref<7x28xf32, #tpu.memory_space<vmem>>, vector<7x28xf32>
    %c0_11 = arith.constant 0 : index
    %c0_12 = arith.constant 0 : index
    %10 = vector.load %arg5[%c0_11, %c0_12] : memref<7x28xf32, #tpu.memory_space<vmem>>, vector<7x28xf32>
    %c0_13 = arith.constant 0 : index
    %c0_14 = arith.constant 0 : index
    %11 = vector.load %arg6[%c0_13, %c0_14] : memref<7x28xf32, #tpu.memory_space<vmem>>, vector<7x28xf32>
    %c0_15 = arith.constant 0 : index
    %c0_16 = arith.constant 0 : index
    %12 = vector.load %arg7[%c0_15, %c0_16] : memref<1x28xf32, #tpu.memory_space<vmem>>, vector<1x28xf32>
    %cst_17 = arith.constant 0.000000e+00 : f32
    %13 = vector.broadcast %cst_17 : f32 to vector<8x7xf32>
    %c0_i32 = arith.constant 0 : i32
    %14 = arith.index_cast %c0_i32 : i32 to index
    %c0_18 = arith.constant 0 : index
    %c0_19 = arith.constant 0 : index
    %15 = vector.load %arg9[%14, %c0_18, %c0_19] : memref<8x8x28xf32, #tpu.memory_space<vmem>>, vector<1x8x28xf32>
    %16 = vector.shape_cast %15 : vector<1x8x28xf32> to vector<8x28xf32>
    %cst_20 = arith.constant dense<0.000000e+00> : vector<8x28xf32>
    %17 = tpu.matmul %13, %9, %cst_20 {dimension_numbers = #tpu.dot_dimension_numbers<[1], [0], [0], [1], [0, 0, 1, 1], [], []>} : vector<8x7xf32>, vector<7x28xf32>, vector<8x28xf32> -> vector<8x28xf32>
    %18 = arith.addf %16, %17 : vector<8x28xf32>
    %19 = vector.extract_strided_slice %18 {offsets = [0, 0], sizes = [8, 7], strides = [1, 1]} : vector<8x28xf32> to vector<8x7xf32>
    %20 = arith.negf %19 : vector<8x7xf32>
    %21 = math.exp %20 : vector<8x7xf32>
    %cst_21 = arith.constant 1.000000e+00 : f32
    %22 = vector.broadcast %cst_21 : f32 to vector<8x7xf32>
    %23 = arith.addf %22, %21 : vector<8x7xf32>
    %24 = arith.divf %22, %23 : vector<8x7xf32>
    %25 = vector.extract_strided_slice %18 {offsets = [0, 7], sizes = [8, 7], strides = [1, 1]} : vector<8x28xf32> to vector<8x7xf32>
    %26 = arith.negf %25 : vector<8x7xf32>
    %27 = math.exp %26 : vector<8x7xf32>
    %cst_22 = arith.constant 1.000000e+00 : f32
    %28 = vector.broadcast %cst_22 : f32 to vector<8x7xf32>
    %29 = arith.addf %28, %27 : vector<8x7xf32>
    %30 = arith.divf %28, %29 : vector<8x7xf32>
    %31 = vector.extract_strided_slice %18 {offsets = [0, 14], sizes = [8, 7], strides = [1, 1]} : vector<8x28xf32> to vector<8x7xf32>
    %32 = math.tanh %31 : vector<8x7xf32>
    %33 = vector.extract_strided_slice %18 {offsets = [0, 21], sizes = [8, 7], strides = [1, 1]} : vector<8x28xf32> to vector<8x7xf32>
    %34 = arith.negf %33 : vector<8x7xf32>
    %35 = math.exp %34 : vector<8x7xf32>
    %cst_23 = arith.constant 1.000000e+00 : f32
    %36 = vector.broadcast %cst_23 : f32 to vector<8x7xf32>
    %37 = arith.addf %36, %35 : vector<8x7xf32>
    %38 = arith.divf %36, %37 : vector<8x7xf32>
    %39 = arith.mulf %30, %13 : vector<8x7xf32>
    %40 = arith.mulf %24, %32 : vector<8x7xf32>
    %41 = arith.addf %39, %40 : vector<8x7xf32>
    %42 = math.tanh %41 : vector<8x7xf32>
    %43 = arith.mulf %38, %42 : vector<8x7xf32>
    %cst_24 = arith.constant dense<0.000000e+00> : vector<8x28xf32>
    %44 = tpu.matmul %43, %10, %cst_24 {dimension_numbers = #tpu.dot_dimension_numbers<[1], [0], [0], [1], [0, 0, 1, 1], [], []>} : vector<8x7xf32>, vector<7x28xf32>, vector<8x28xf32> -> vector<8x28xf32>
    %cst_25 = arith.constant dense<0.000000e+00> : vector<8x28xf32>
    %45 = tpu.matmul %13, %11, %cst_25 {dimension_numbers = #tpu.dot_dimension_numbers<[1], [0], [0], [1], [0, 0, 1, 1], [], []>} : vector<8x7xf32>, vector<7x28xf32>, vector<8x28xf32> -> vector<8x28xf32>
    %46 = arith.addf %44, %45 : vector<8x28xf32>
    %47 = vector.broadcast %12 : vector<1x28xf32> to vector<8x28xf32>
    %48 = arith.addf %46, %47 : vector<8x28xf32>
    %49 = vector.extract_strided_slice %48 {offsets = [0, 0], sizes = [8, 7], strides = [1, 1]} : vector<8x28xf32> to vector<8x7xf32>
    %50 = arith.negf %49 : vector<8x7xf32>
    %51 = math.exp %50 : vector<8x7xf32>
    %cst_26 = arith.constant 1.000000e+00 : f32
    %52 = vector.broadcast %cst_26 : f32 to vector<8x7xf32>
    %53 = arith.addf %52, %51 : vector<8x7xf32>
    %54 = arith.divf %52, %53 : vector<8x7xf32>
    %55 = vector.extract_strided_slice %48 {offsets = [0, 7], sizes = [8, 7], strides = [1, 1]} : vector<8x28xf32> to vector<8x7xf32>
    %56 = arith.negf %55 : vector<8x7xf32>
    %57 = math.exp %56 : vector<8x7xf32>
    %cst_27 = arith.constant 1.000000e+00 : f32
    %58 = vector.broadcast %cst_27 : f32 to vector<8x7xf32>
    %59 = arith.addf %58, %57 : vector<8x7xf32>
    %60 = arith.divf %58, %59 : vector<8x7xf32>
    %61 = vector.extract_strided_slice %48 {offsets = [0, 14], sizes = [8, 7], strides = [1, 1]} : vector<8x28xf32> to vector<8x7xf32>
    %62 = math.tanh %61 : vector<8x7xf32>
    %63 = vector.extract_strided_slice %48 {offsets = [0, 21], sizes = [8, 7], strides = [1, 1]} : vector<8x28xf32> to vector<8x7xf32>
    %64 = arith.negf %63 : vector<8x7xf32>
    %65 = math.exp %64 : vector<8x7xf32>
    %cst_28 = arith.constant 1.000000e+00 : f32
    %66 = vector.broadcast %cst_28 : f32 to vector<8x7xf32>
    %67 = arith.addf %66, %65 : vector<8x7xf32>
    %68 = arith.divf %66, %67 : vector<8x7xf32>
    %69 = arith.mulf %60, %13 : vector<8x7xf32>
    %70 = arith.mulf %54, %62 : vector<8x7xf32>
    %71 = arith.addf %69, %70 : vector<8x7xf32>
    %72 = math.tanh %71 : vector<8x7xf32>
    %73 = arith.mulf %68, %72 : vector<8x7xf32>
    %c1_i32 = arith.constant 1 : i32
    %74 = arith.index_cast %c1_i32 : i32 to index
    %c0_29 = arith.constant 0 : index
    %c0_30 = arith.constant 0 : index
    %75 = vector.load %arg9[%74, %c0_29, %c0_30] : memref<8x8x28xf32, #tpu.memory_space<vmem>>, vector<1x8x28xf32>
    %76 = vector.shape_cast %75 : vector<1x8x28xf32> to vector<8x28xf32>
    %cst_31 = arith.constant dense<0.000000e+00> : vector<8x28xf32>
    %77 = tpu.matmul %43, %9, %cst_31 {dimension_numbers = #tpu.dot_dimension_numbers<[1], [0], [0], [1], [0, 0, 1, 1], [], []>} : vector<8x7xf32>, vector<7x28xf32>, vector<8x28xf32> -> vector<8x28xf32>
    %78 = arith.addf %76, %77 : vector<8x28xf32>
    %79 = vector.extract_strided_slice %78 {offsets = [0, 0], sizes = [8, 7], strides = [1, 1]} : vector<8x28xf32> to vector<8x7xf32>
    %80 = arith.negf %79 : vector<8x7xf32>
    %81 = math.exp %80 : vector<8x7xf32>
    %cst_32 = arith.constant 1.000000e+00 : f32
    %82 = vector.broadcast %cst_32 : f32 to vector<8x7xf32>
    %83 = arith.addf %82, %81 : vector<8x7xf32>
    %84 = arith.divf %82, %83 : vector<8x7xf32>
    %85 = vector.extract_strided_slice %78 {offsets = [0, 7], sizes = [8, 7], strides = [1, 1]} : vector<8x28xf32> to vector<8x7xf32>
    %86 = arith.negf %85 : vector<8x7xf32>
    %87 = math.exp %86 : vector<8x7xf32>
    %cst_33 = arith.constant 1.000000e+00 : f32
    %88 = vector.broadcast %cst_33 : f32 to vector<8x7xf32>
    %89 = arith.addf %88, %87 : vector<8x7xf32>
    %90 = arith.divf %88, %89 : vector<8x7xf32>
    %91 = vector.extract_strided_slice %78 {offsets = [0, 14], sizes = [8, 7], strides = [1, 1]} : vector<8x28xf32> to vector<8x7xf32>
    %92 = math.tanh %91 : vector<8x7xf32>
    %93 = vector.extract_strided_slice %78 {offsets = [0, 21], sizes = [8, 7], strides = [1, 1]} : vector<8x28xf32> to vector<8x7xf32>
    %94 = arith.negf %93 : vector<8x7xf32>
    %95 = math.exp %94 : vector<8x7xf32>
    %cst_34 = arith.constant 1.000000e+00 : f32
    %96 = vector.broadcast %cst_34 : f32 to vector<8x7xf32>
    %97 = arith.addf %96, %95 : vector<8x7xf32>
    %98 = arith.divf %96, %97 : vector<8x7xf32>
    %99 = arith.mulf %90, %41 : vector<8x7xf32>
    %100 = arith.mulf %84, %92 : vector<8x7xf32>
    %101 = arith.addf %99, %100 : vector<8x7xf32>
    %102 = math.tanh %101 : vector<8x7xf32>
    %103 = arith.mulf %98, %102 : vector<8x7xf32>
    %cst_35 = arith.constant dense<0.000000e+00> : vector<8x28xf32>
    %104 = tpu.matmul %103, %10, %cst_35 {dimension_numbers = #tpu.dot_dimension_numbers<[1], [0], [0], [1], [0, 0, 1, 1], [], []>} : vector<8x7xf32>, vector<7x28xf32>, vector<8x28xf32> -> vector<8x28xf32>
    %cst_36 = arith.constant dense<0.000000e+00> : vector<8x28xf32>
    %105 = tpu.matmul %73, %11, %cst_36 {dimension_numbers = #tpu.dot_dimension_numbers<[1], [0], [0], [1], [0, 0, 1, 1], [], []>} : vector<8x7xf32>, vector<7x28xf32>, vector<8x28xf32> -> vector<8x28xf32>
    %106 = arith.addf %104, %105 : vector<8x28xf32>
    %107 = vector.broadcast %12 : vector<1x28xf32> to vector<8x28xf32>
    %108 = arith.addf %106, %107 : vector<8x28xf32>
    %109 = vector.extract_strided_slice %108 {offsets = [0, 0], sizes = [8, 7], strides = [1, 1]} : vector<8x28xf32> to vector<8x7xf32>
    %110 = arith.negf %109 : vector<8x7xf32>
    %111 = math.exp %110 : vector<8x7xf32>
    %cst_37 = arith.constant 1.000000e+00 : f32
    %112 = vector.broadcast %cst_37 : f32 to vector<8x7xf32>
    %113 = arith.addf %112, %111 : vector<8x7xf32>
    %114 = arith.divf %112, %113 : vector<8x7xf32>
    %115 = vector.extract_strided_slice %108 {offsets = [0, 7], sizes = [8, 7], strides = [1, 1]} : vector<8x28xf32> to vector<8x7xf32>
    %116 = arith.negf %115 : vector<8x7xf32>
    %117 = math.exp %116 : vector<8x7xf32>
    %cst_38 = arith.constant 1.000000e+00 : f32
    %118 = vector.broadcast %cst_38 : f32 to vector<8x7xf32>
    %119 = arith.addf %118, %117 : vector<8x7xf32>
    %120 = arith.divf %118, %119 : vector<8x7xf32>
    %121 = vector.extract_strided_slice %108 {offsets = [0, 14], sizes = [8, 7], strides = [1, 1]} : vector<8x28xf32> to vector<8x7xf32>
    %122 = math.tanh %121 : vector<8x7xf32>
    %123 = vector.extract_strided_slice %108 {offsets = [0, 21], sizes = [8, 7], strides = [1, 1]} : vector<8x28xf32> to vector<8x7xf32>
    %124 = arith.negf %123 : vector<8x7xf32>
    %125 = math.exp %124 : vector<8x7xf32>
    %cst_39 = arith.constant 1.000000e+00 : f32
    %126 = vector.broadcast %cst_39 : f32 to vector<8x7xf32>
    %127 = arith.addf %126, %125 : vector<8x7xf32>
    %128 = arith.divf %126, %127 : vector<8x7xf32>
    %129 = arith.mulf %120, %71 : vector<8x7xf32>
    %130 = arith.mulf %114, %122 : vector<8x7xf32>
    %131 = arith.addf %129, %130 : vector<8x7xf32>
    %132 = math.tanh %131 : vector<8x7xf32>
    %133 = arith.mulf %128, %132 : vector<8x7xf32>
    %c2_i32 = arith.constant 2 : i32
    %134 = arith.index_cast %c2_i32 : i32 to index
    %c0_40 = arith.constant 0 : index
    %c0_41 = arith.constant 0 : index
    %135 = vector.load %arg9[%134, %c0_40, %c0_41] : memref<8x8x28xf32, #tpu.memory_space<vmem>>, vector<1x8x28xf32>
    %136 = vector.shape_cast %135 : vector<1x8x28xf32> to vector<8x28xf32>
    %cst_42 = arith.constant dense<0.000000e+00> : vector<8x28xf32>
    %137 = tpu.matmul %103, %9, %cst_42 {dimension_numbers = #tpu.dot_dimension_numbers<[1], [0], [0], [1], [0, 0, 1, 1], [], []>} : vector<8x7xf32>, vector<7x28xf32>, vector<8x28xf32> -> vector<8x28xf32>
    %138 = arith.addf %136, %137 : vector<8x28xf32>
    %139 = vector.extract_strided_slice %138 {offsets = [0, 0], sizes = [8, 7], strides = [1, 1]} : vector<8x28xf32> to vector<8x7xf32>
    %140 = arith.negf %139 : vector<8x7xf32>
    %141 = math.exp %140 : vector<8x7xf32>
    %cst_43 = arith.constant 1.000000e+00 : f32
    %142 = vector.broadcast %cst_43 : f32 to vector<8x7xf32>
    %143 = arith.addf %142, %141 : vector<8x7xf32>
    %144 = arith.divf %142, %143 : vector<8x7xf32>
    %145 = vector.extract_strided_slice %138 {offsets = [0, 7], sizes = [8, 7], strides = [1, 1]} : vector<8x28xf32> to vector<8x7xf32>
    %146 = arith.negf %145 : vector<8x7xf32>
    %147 = math.exp %146 : vector<8x7xf32>
    %cst_44 = arith.constant 1.000000e+00 : f32
    %148 = vector.broadcast %cst_44 : f32 to vector<8x7xf32>
    %149 = arith.addf %148, %147 : vector<8x7xf32>
    %150 = arith.divf %148, %149 : vector<8x7xf32>
    %151 = vector.extract_strided_slice %138 {offsets = [0, 14], sizes = [8, 7], strides = [1, 1]} : vector<8x28xf32> to vector<8x7xf32>
    %152 = math.tanh %151 : vector<8x7xf32>
    %153 = vector.extract_strided_slice %138 {offsets = [0, 21], sizes = [8, 7], strides = [1, 1]} : vector<8x28xf32> to vector<8x7xf32>
    %154 = arith.negf %153 : vector<8x7xf32>
    %155 = math.exp %154 : vector<8x7xf32>
    %cst_45 = arith.constant 1.000000e+00 : f32
    %156 = vector.broadcast %cst_45 : f32 to vector<8x7xf32>
    %157 = arith.addf %156, %155 : vector<8x7xf32>
    %158 = arith.divf %156, %157 : vector<8x7xf32>
    %159 = arith.mulf %150, %101 : vector<8x7xf32>
    %160 = arith.mulf %144, %152 : vector<8x7xf32>
    %161 = arith.addf %159, %160 : vector<8x7xf32>
    %162 = math.tanh %161 : vector<8x7xf32>
    %163 = arith.mulf %158, %162 : vector<8x7xf32>
    %cst_46 = arith.constant dense<0.000000e+00> : vector<8x28xf32>
    %164 = tpu.matmul %163, %10, %cst_46 {dimension_numbers = #tpu.dot_dimension_numbers<[1], [0], [0], [1], [0, 0, 1, 1], [], []>} : vector<8x7xf32>, vector<7x28xf32>, vector<8x28xf32> -> vector<8x28xf32>
    %cst_47 = arith.constant dense<0.000000e+00> : vector<8x28xf32>
    %165 = tpu.matmul %133, %11, %cst_47 {dimension_numbers = #tpu.dot_dimension_numbers<[1], [0], [0], [1], [0, 0, 1, 1], [], []>} : vector<8x7xf32>, vector<7x28xf32>, vector<8x28xf32> -> vector<8x28xf32>
    %166 = arith.addf %164, %165 : vector<8x28xf32>
    %167 = vector.broadcast %12 : vector<1x28xf32> to vector<8x28xf32>
    %168 = arith.addf %166, %167 : vector<8x28xf32>
    %169 = vector.extract_strided_slice %168 {offsets = [0, 0], sizes = [8, 7], strides = [1, 1]} : vector<8x28xf32> to vector<8x7xf32>
    %170 = arith.negf %169 : vector<8x7xf32>
    %171 = math.exp %170 : vector<8x7xf32>
    %cst_48 = arith.constant 1.000000e+00 : f32
    %172 = vector.broadcast %cst_48 : f32 to vector<8x7xf32>
    %173 = arith.addf %172, %171 : vector<8x7xf32>
    %174 = arith.divf %172, %173 : vector<8x7xf32>
    %175 = vector.extract_strided_slice %168 {offsets = [0, 7], sizes = [8, 7], strides = [1, 1]} : vector<8x28xf32> to vector<8x7xf32>
    %176 = arith.negf %175 : vector<8x7xf32>
    %177 = math.exp %176 : vector<8x7xf32>
    %cst_49 = arith.constant 1.000000e+00 : f32
    %178 = vector.broadcast %cst_49 : f32 to vector<8x7xf32>
    %179 = arith.addf %178, %177 : vector<8x7xf32>
    %180 = arith.divf %178, %179 : vector<8x7xf32>
    %181 = vector.extract_strided_slice %168 {offsets = [0, 14], sizes = [8, 7], strides = [1, 1]} : vector<8x28xf32> to vector<8x7xf32>
    %182 = math.tanh %181 : vector<8x7xf32>
    %183 = vector.extract_strided_slice %168 {offsets = [0, 21], sizes = [8, 7], strides = [1, 1]} : vector<8x28xf32> to vector<8x7xf32>
    %184 = arith.negf %183 : vector<8x7xf32>
    %185 = math.exp %184 : vector<8x7xf32>
    %cst_50 = arith.constant 1.000000e+00 : f32
    %186 = vector.broadcast %cst_50 : f32 to vector<8x7xf32>
    %187 = arith.addf %186, %185 : vector<8x7xf32>
    %188 = arith.divf %186, %187 : vector<8x7xf32>
    %189 = arith.mulf %180, %131 : vector<8x7xf32>
    %190 = arith.mulf %174, %182 : vector<8x7xf32>
    %191 = arith.addf %189, %190 : vector<8x7xf32>
    %192 = math.tanh %191 : vector<8x7xf32>
    %193 = arith.mulf %188, %192 : vector<8x7xf32>
    %c3_i32 = arith.constant 3 : i32
    %194 = arith.index_cast %c3_i32 : i32 to index
    %c0_51 = arith.constant 0 : index
    %c0_52 = arith.constant 0 : index
    %195 = vector.load %arg9[%194, %c0_51, %c0_52] : memref<8x8x28xf32, #tpu.memory_space<vmem>>, vector<1x8x28xf32>
    %196 = vector.shape_cast %195 : vector<1x8x28xf32> to vector<8x28xf32>
    %cst_53 = arith.constant dense<0.000000e+00> : vector<8x28xf32>
    %197 = tpu.matmul %163, %9, %cst_53 {dimension_numbers = #tpu.dot_dimension_numbers<[1], [0], [0], [1], [0, 0, 1, 1], [], []>} : vector<8x7xf32>, vector<7x28xf32>, vector<8x28xf32> -> vector<8x28xf32>
    %198 = arith.addf %196, %197 : vector<8x28xf32>
    %199 = vector.extract_strided_slice %198 {offsets = [0, 0], sizes = [8, 7], strides = [1, 1]} : vector<8x28xf32> to vector<8x7xf32>
    %200 = arith.negf %199 : vector<8x7xf32>
    %201 = math.exp %200 : vector<8x7xf32>
    %cst_54 = arith.constant 1.000000e+00 : f32
    %202 = vector.broadcast %cst_54 : f32 to vector<8x7xf32>
    %203 = arith.addf %202, %201 : vector<8x7xf32>
    %204 = arith.divf %202, %203 : vector<8x7xf32>
    %205 = vector.extract_strided_slice %198 {offsets = [0, 7], sizes = [8, 7], strides = [1, 1]} : vector<8x28xf32> to vector<8x7xf32>
    %206 = arith.negf %205 : vector<8x7xf32>
    %207 = math.exp %206 : vector<8x7xf32>
    %cst_55 = arith.constant 1.000000e+00 : f32
    %208 = vector.broadcast %cst_55 : f32 to vector<8x7xf32>
    %209 = arith.addf %208, %207 : vector<8x7xf32>
    %210 = arith.divf %208, %209 : vector<8x7xf32>
    %211 = vector.extract_strided_slice %198 {offsets = [0, 14], sizes = [8, 7], strides = [1, 1]} : vector<8x28xf32> to vector<8x7xf32>
    %212 = math.tanh %211 : vector<8x7xf32>
    %213 = vector.extract_strided_slice %198 {offsets = [0, 21], sizes = [8, 7], strides = [1, 1]} : vector<8x28xf32> to vector<8x7xf32>
    %214 = arith.negf %213 : vector<8x7xf32>
    %215 = math.exp %214 : vector<8x7xf32>
    %cst_56 = arith.constant 1.000000e+00 : f32
    %216 = vector.broadcast %cst_56 : f32 to vector<8x7xf32>
    %217 = arith.addf %216, %215 : vector<8x7xf32>
    %218 = arith.divf %216, %217 : vector<8x7xf32>
    %219 = arith.mulf %210, %161 : vector<8x7xf32>
    %220 = arith.mulf %204, %212 : vector<8x7xf32>
    %221 = arith.addf %219, %220 : vector<8x7xf32>
    %222 = math.tanh %221 : vector<8x7xf32>
    %223 = arith.mulf %218, %222 : vector<8x7xf32>
    %cst_57 = arith.constant dense<0.000000e+00> : vector<8x28xf32>
    %224 = tpu.matmul %223, %10, %cst_57 {dimension_numbers = #tpu.dot_dimension_numbers<[1], [0], [0], [1], [0, 0, 1, 1], [], []>} : vector<8x7xf32>, vector<7x28xf32>, vector<8x28xf32> -> vector<8x28xf32>
    %cst_58 = arith.constant dense<0.000000e+00> : vector<8x28xf32>
    %225 = tpu.matmul %193, %11, %cst_58 {dimension_numbers = #tpu.dot_dimension_numbers<[1], [0], [0], [1], [0, 0, 1, 1], [], []>} : vector<8x7xf32>, vector<7x28xf32>, vector<8x28xf32> -> vector<8x28xf32>
    %226 = arith.addf %224, %225 : vector<8x28xf32>
    %227 = vector.broadcast %12 : vector<1x28xf32> to vector<8x28xf32>
    %228 = arith.addf %226, %227 : vector<8x28xf32>
    %229 = vector.extract_strided_slice %228 {offsets = [0, 0], sizes = [8, 7], strides = [1, 1]} : vector<8x28xf32> to vector<8x7xf32>
    %230 = arith.negf %229 : vector<8x7xf32>
    %231 = math.exp %230 : vector<8x7xf32>
    %cst_59 = arith.constant 1.000000e+00 : f32
    %232 = vector.broadcast %cst_59 : f32 to vector<8x7xf32>
    %233 = arith.addf %232, %231 : vector<8x7xf32>
    %234 = arith.divf %232, %233 : vector<8x7xf32>
    %235 = vector.extract_strided_slice %228 {offsets = [0, 7], sizes = [8, 7], strides = [1, 1]} : vector<8x28xf32> to vector<8x7xf32>
    %236 = arith.negf %235 : vector<8x7xf32>
    %237 = math.exp %236 : vector<8x7xf32>
    %cst_60 = arith.constant 1.000000e+00 : f32
    %238 = vector.broadcast %cst_60 : f32 to vector<8x7xf32>
    %239 = arith.addf %238, %237 : vector<8x7xf32>
    %240 = arith.divf %238, %239 : vector<8x7xf32>
    %241 = vector.extract_strided_slice %228 {offsets = [0, 14], sizes = [8, 7], strides = [1, 1]} : vector<8x28xf32> to vector<8x7xf32>
    %242 = math.tanh %241 : vector<8x7xf32>
    %243 = vector.extract_strided_slice %228 {offsets = [0, 21], sizes = [8, 7], strides = [1, 1]} : vector<8x28xf32> to vector<8x7xf32>
    %244 = arith.negf %243 : vector<8x7xf32>
    %245 = math.exp %244 : vector<8x7xf32>
    %cst_61 = arith.constant 1.000000e+00 : f32
    %246 = vector.broadcast %cst_61 : f32 to vector<8x7xf32>
    %247 = arith.addf %246, %245 : vector<8x7xf32>
    %248 = arith.divf %246, %247 : vector<8x7xf32>
    %249 = arith.mulf %240, %191 : vector<8x7xf32>
    %250 = arith.mulf %234, %242 : vector<8x7xf32>
    %251 = arith.addf %249, %250 : vector<8x7xf32>
    %252 = math.tanh %251 : vector<8x7xf32>
    %253 = arith.mulf %248, %252 : vector<8x7xf32>
    %c4_i32 = arith.constant 4 : i32
    %254 = arith.index_cast %c4_i32 : i32 to index
    %c0_62 = arith.constant 0 : index
    %c0_63 = arith.constant 0 : index
    %255 = vector.load %arg9[%254, %c0_62, %c0_63] : memref<8x8x28xf32, #tpu.memory_space<vmem>>, vector<1x8x28xf32>
    %256 = vector.shape_cast %255 : vector<1x8x28xf32> to vector<8x28xf32>
    %cst_64 = arith.constant dense<0.000000e+00> : vector<8x28xf32>
    %257 = tpu.matmul %223, %9, %cst_64 {dimension_numbers = #tpu.dot_dimension_numbers<[1], [0], [0], [1], [0, 0, 1, 1], [], []>} : vector<8x7xf32>, vector<7x28xf32>, vector<8x28xf32> -> vector<8x28xf32>
    %258 = arith.addf %256, %257 : vector<8x28xf32>
    %259 = vector.extract_strided_slice %258 {offsets = [0, 0], sizes = [8, 7], strides = [1, 1]} : vector<8x28xf32> to vector<8x7xf32>
    %260 = arith.negf %259 : vector<8x7xf32>
    %261 = math.exp %260 : vector<8x7xf32>
    %cst_65 = arith.constant 1.000000e+00 : f32
    %262 = vector.broadcast %cst_65 : f32 to vector<8x7xf32>
    %263 = arith.addf %262, %261 : vector<8x7xf32>
    %264 = arith.divf %262, %263 : vector<8x7xf32>
    %265 = vector.extract_strided_slice %258 {offsets = [0, 7], sizes = [8, 7], strides = [1, 1]} : vector<8x28xf32> to vector<8x7xf32>
    %266 = arith.negf %265 : vector<8x7xf32>
    %267 = math.exp %266 : vector<8x7xf32>
    %cst_66 = arith.constant 1.000000e+00 : f32
    %268 = vector.broadcast %cst_66 : f32 to vector<8x7xf32>
    %269 = arith.addf %268, %267 : vector<8x7xf32>
    %270 = arith.divf %268, %269 : vector<8x7xf32>
    %271 = vector.extract_strided_slice %258 {offsets = [0, 14], sizes = [8, 7], strides = [1, 1]} : vector<8x28xf32> to vector<8x7xf32>
    %272 = math.tanh %271 : vector<8x7xf32>
    %273 = vector.extract_strided_slice %258 {offsets = [0, 21], sizes = [8, 7], strides = [1, 1]} : vector<8x28xf32> to vector<8x7xf32>
    %274 = arith.negf %273 : vector<8x7xf32>
    %275 = math.exp %274 : vector<8x7xf32>
    %cst_67 = arith.constant 1.000000e+00 : f32
    %276 = vector.broadcast %cst_67 : f32 to vector<8x7xf32>
    %277 = arith.addf %276, %275 : vector<8x7xf32>
    %278 = arith.divf %276, %277 : vector<8x7xf32>
    %279 = arith.mulf %270, %221 : vector<8x7xf32>
    %280 = arith.mulf %264, %272 : vector<8x7xf32>
    %281 = arith.addf %279, %280 : vector<8x7xf32>
    %282 = math.tanh %281 : vector<8x7xf32>
    %283 = arith.mulf %278, %282 : vector<8x7xf32>
    %cst_68 = arith.constant dense<0.000000e+00> : vector<8x28xf32>
    %284 = tpu.matmul %283, %10, %cst_68 {dimension_numbers = #tpu.dot_dimension_numbers<[1], [0], [0], [1], [0, 0, 1, 1], [], []>} : vector<8x7xf32>, vector<7x28xf32>, vector<8x28xf32> -> vector<8x28xf32>
    %cst_69 = arith.constant dense<0.000000e+00> : vector<8x28xf32>
    %285 = tpu.matmul %253, %11, %cst_69 {dimension_numbers = #tpu.dot_dimension_numbers<[1], [0], [0], [1], [0, 0, 1, 1], [], []>} : vector<8x7xf32>, vector<7x28xf32>, vector<8x28xf32> -> vector<8x28xf32>
    %286 = arith.addf %284, %285 : vector<8x28xf32>
    %287 = vector.broadcast %12 : vector<1x28xf32> to vector<8x28xf32>
    %288 = arith.addf %286, %287 : vector<8x28xf32>
    %289 = vector.extract_strided_slice %288 {offsets = [0, 0], sizes = [8, 7], strides = [1, 1]} : vector<8x28xf32> to vector<8x7xf32>
    %290 = arith.negf %289 : vector<8x7xf32>
    %291 = math.exp %290 : vector<8x7xf32>
    %cst_70 = arith.constant 1.000000e+00 : f32
    %292 = vector.broadcast %cst_70 : f32 to vector<8x7xf32>
    %293 = arith.addf %292, %291 : vector<8x7xf32>
    %294 = arith.divf %292, %293 : vector<8x7xf32>
    %295 = vector.extract_strided_slice %288 {offsets = [0, 7], sizes = [8, 7], strides = [1, 1]} : vector<8x28xf32> to vector<8x7xf32>
    %296 = arith.negf %295 : vector<8x7xf32>
    %297 = math.exp %296 : vector<8x7xf32>
    %cst_71 = arith.constant 1.000000e+00 : f32
    %298 = vector.broadcast %cst_71 : f32 to vector<8x7xf32>
    %299 = arith.addf %298, %297 : vector<8x7xf32>
    %300 = arith.divf %298, %299 : vector<8x7xf32>
    %301 = vector.extract_strided_slice %288 {offsets = [0, 14], sizes = [8, 7], strides = [1, 1]} : vector<8x28xf32> to vector<8x7xf32>
    %302 = math.tanh %301 : vector<8x7xf32>
    %303 = vector.extract_strided_slice %288 {offsets = [0, 21], sizes = [8, 7], strides = [1, 1]} : vector<8x28xf32> to vector<8x7xf32>
    %304 = arith.negf %303 : vector<8x7xf32>
    %305 = math.exp %304 : vector<8x7xf32>
    %cst_72 = arith.constant 1.000000e+00 : f32
    %306 = vector.broadcast %cst_72 : f32 to vector<8x7xf32>
    %307 = arith.addf %306, %305 : vector<8x7xf32>
    %308 = arith.divf %306, %307 : vector<8x7xf32>
    %309 = arith.mulf %300, %251 : vector<8x7xf32>
    %310 = arith.mulf %294, %302 : vector<8x7xf32>
    %311 = arith.addf %309, %310 : vector<8x7xf32>
    %312 = math.tanh %311 : vector<8x7xf32>
    %313 = arith.mulf %308, %312 : vector<8x7xf32>
    %c5_i32 = arith.constant 5 : i32
    %314 = arith.index_cast %c5_i32 : i32 to index
    %c0_73 = arith.constant 0 : index
    %c0_74 = arith.constant 0 : index
    %315 = vector.load %arg9[%314, %c0_73, %c0_74] : memref<8x8x28xf32, #tpu.memory_space<vmem>>, vector<1x8x28xf32>
    %316 = vector.shape_cast %315 : vector<1x8x28xf32> to vector<8x28xf32>
    %cst_75 = arith.constant dense<0.000000e+00> : vector<8x28xf32>
    %317 = tpu.matmul %283, %9, %cst_75 {dimension_numbers = #tpu.dot_dimension_numbers<[1], [0], [0], [1], [0, 0, 1, 1], [], []>} : vector<8x7xf32>, vector<7x28xf32>, vector<8x28xf32> -> vector<8x28xf32>
    %318 = arith.addf %316, %317 : vector<8x28xf32>
    %319 = vector.extract_strided_slice %318 {offsets = [0, 0], sizes = [8, 7], strides = [1, 1]} : vector<8x28xf32> to vector<8x7xf32>
    %320 = arith.negf %319 : vector<8x7xf32>
    %321 = math.exp %320 : vector<8x7xf32>
    %cst_76 = arith.constant 1.000000e+00 : f32
    %322 = vector.broadcast %cst_76 : f32 to vector<8x7xf32>
    %323 = arith.addf %322, %321 : vector<8x7xf32>
    %324 = arith.divf %322, %323 : vector<8x7xf32>
    %325 = vector.extract_strided_slice %318 {offsets = [0, 7], sizes = [8, 7], strides = [1, 1]} : vector<8x28xf32> to vector<8x7xf32>
    %326 = arith.negf %325 : vector<8x7xf32>
    %327 = math.exp %326 : vector<8x7xf32>
    %cst_77 = arith.constant 1.000000e+00 : f32
    %328 = vector.broadcast %cst_77 : f32 to vector<8x7xf32>
    %329 = arith.addf %328, %327 : vector<8x7xf32>
    %330 = arith.divf %328, %329 : vector<8x7xf32>
    %331 = vector.extract_strided_slice %318 {offsets = [0, 14], sizes = [8, 7], strides = [1, 1]} : vector<8x28xf32> to vector<8x7xf32>
    %332 = math.tanh %331 : vector<8x7xf32>
    %333 = vector.extract_strided_slice %318 {offsets = [0, 21], sizes = [8, 7], strides = [1, 1]} : vector<8x28xf32> to vector<8x7xf32>
    %334 = arith.negf %333 : vector<8x7xf32>
    %335 = math.exp %334 : vector<8x7xf32>
    %cst_78 = arith.constant 1.000000e+00 : f32
    %336 = vector.broadcast %cst_78 : f32 to vector<8x7xf32>
    %337 = arith.addf %336, %335 : vector<8x7xf32>
    %338 = arith.divf %336, %337 : vector<8x7xf32>
    %339 = arith.mulf %330, %281 : vector<8x7xf32>
    %340 = arith.mulf %324, %332 : vector<8x7xf32>
    %341 = arith.addf %339, %340 : vector<8x7xf32>
    %342 = math.tanh %341 : vector<8x7xf32>
    %343 = arith.mulf %338, %342 : vector<8x7xf32>
    %cst_79 = arith.constant dense<0.000000e+00> : vector<8x28xf32>
    %344 = tpu.matmul %343, %10, %cst_79 {dimension_numbers = #tpu.dot_dimension_numbers<[1], [0], [0], [1], [0, 0, 1, 1], [], []>} : vector<8x7xf32>, vector<7x28xf32>, vector<8x28xf32> -> vector<8x28xf32>
    %cst_80 = arith.constant dense<0.000000e+00> : vector<8x28xf32>
    %345 = tpu.matmul %313, %11, %cst_80 {dimension_numbers = #tpu.dot_dimension_numbers<[1], [0], [0], [1], [0, 0, 1, 1], [], []>} : vector<8x7xf32>, vector<7x28xf32>, vector<8x28xf32> -> vector<8x28xf32>
    %346 = arith.addf %344, %345 : vector<8x28xf32>
    %347 = vector.broadcast %12 : vector<1x28xf32> to vector<8x28xf32>
    %348 = arith.addf %346, %347 : vector<8x28xf32>
    %349 = vector.extract_strided_slice %348 {offsets = [0, 0], sizes = [8, 7], strides = [1, 1]} : vector<8x28xf32> to vector<8x7xf32>
    %350 = arith.negf %349 : vector<8x7xf32>
    %351 = math.exp %350 : vector<8x7xf32>
    %cst_81 = arith.constant 1.000000e+00 : f32
    %352 = vector.broadcast %cst_81 : f32 to vector<8x7xf32>
    %353 = arith.addf %352, %351 : vector<8x7xf32>
    %354 = arith.divf %352, %353 : vector<8x7xf32>
    %355 = vector.extract_strided_slice %348 {offsets = [0, 7], sizes = [8, 7], strides = [1, 1]} : vector<8x28xf32> to vector<8x7xf32>
    %356 = arith.negf %355 : vector<8x7xf32>
    %357 = math.exp %356 : vector<8x7xf32>
    %cst_82 = arith.constant 1.000000e+00 : f32
    %358 = vector.broadcast %cst_82 : f32 to vector<8x7xf32>
    %359 = arith.addf %358, %357 : vector<8x7xf32>
    %360 = arith.divf %358, %359 : vector<8x7xf32>
    %361 = vector.extract_strided_slice %348 {offsets = [0, 14], sizes = [8, 7], strides = [1, 1]} : vector<8x28xf32> to vector<8x7xf32>
    %362 = math.tanh %361 : vector<8x7xf32>
    %363 = vector.extract_strided_slice %348 {offsets = [0, 21], sizes = [8, 7], strides = [1, 1]} : vector<8x28xf32> to vector<8x7xf32>
    %364 = arith.negf %363 : vector<8x7xf32>
    %365 = math.exp %364 : vector<8x7xf32>
    %cst_83 = arith.constant 1.000000e+00 : f32
    %366 = vector.broadcast %cst_83 : f32 to vector<8x7xf32>
    %367 = arith.addf %366, %365 : vector<8x7xf32>
    %368 = arith.divf %366, %367 : vector<8x7xf32>
    %369 = arith.mulf %360, %311 : vector<8x7xf32>
    %370 = arith.mulf %354, %362 : vector<8x7xf32>
    %371 = arith.addf %369, %370 : vector<8x7xf32>
    %372 = math.tanh %371 : vector<8x7xf32>
    %373 = arith.mulf %368, %372 : vector<8x7xf32>
    %c6_i32 = arith.constant 6 : i32
    %374 = arith.index_cast %c6_i32 : i32 to index
    %c0_84 = arith.constant 0 : index
    %c0_85 = arith.constant 0 : index
    %375 = vector.load %arg9[%374, %c0_84, %c0_85] : memref<8x8x28xf32, #tpu.memory_space<vmem>>, vector<1x8x28xf32>
    %376 = vector.shape_cast %375 : vector<1x8x28xf32> to vector<8x28xf32>
    %cst_86 = arith.constant dense<0.000000e+00> : vector<8x28xf32>
    %377 = tpu.matmul %343, %9, %cst_86 {dimension_numbers = #tpu.dot_dimension_numbers<[1], [0], [0], [1], [0, 0, 1, 1], [], []>} : vector<8x7xf32>, vector<7x28xf32>, vector<8x28xf32> -> vector<8x28xf32>
    %378 = arith.addf %376, %377 : vector<8x28xf32>
    %379 = vector.extract_strided_slice %378 {offsets = [0, 0], sizes = [8, 7], strides = [1, 1]} : vector<8x28xf32> to vector<8x7xf32>
    %380 = arith.negf %379 : vector<8x7xf32>
    %381 = math.exp %380 : vector<8x7xf32>
    %cst_87 = arith.constant 1.000000e+00 : f32
    %382 = vector.broadcast %cst_87 : f32 to vector<8x7xf32>
    %383 = arith.addf %382, %381 : vector<8x7xf32>
    %384 = arith.divf %382, %383 : vector<8x7xf32>
    %385 = vector.extract_strided_slice %378 {offsets = [0, 7], sizes = [8, 7], strides = [1, 1]} : vector<8x28xf32> to vector<8x7xf32>
    %386 = arith.negf %385 : vector<8x7xf32>
    %387 = math.exp %386 : vector<8x7xf32>
    %cst_88 = arith.constant 1.000000e+00 : f32
    %388 = vector.broadcast %cst_88 : f32 to vector<8x7xf32>
    %389 = arith.addf %388, %387 : vector<8x7xf32>
    %390 = arith.divf %388, %389 : vector<8x7xf32>
    %391 = vector.extract_strided_slice %378 {offsets = [0, 14], sizes = [8, 7], strides = [1, 1]} : vector<8x28xf32> to vector<8x7xf32>
    %392 = math.tanh %391 : vector<8x7xf32>
    %393 = vector.extract_strided_slice %378 {offsets = [0, 21], sizes = [8, 7], strides = [1, 1]} : vector<8x28xf32> to vector<8x7xf32>
    %394 = arith.negf %393 : vector<8x7xf32>
    %395 = math.exp %394 : vector<8x7xf32>
    %cst_89 = arith.constant 1.000000e+00 : f32
    %396 = vector.broadcast %cst_89 : f32 to vector<8x7xf32>
    %397 = arith.addf %396, %395 : vector<8x7xf32>
    %398 = arith.divf %396, %397 : vector<8x7xf32>
    %399 = arith.mulf %390, %341 : vector<8x7xf32>
    %400 = arith.mulf %384, %392 : vector<8x7xf32>
    %401 = arith.addf %399, %400 : vector<8x7xf32>
    %402 = math.tanh %401 : vector<8x7xf32>
    %403 = arith.mulf %398, %402 : vector<8x7xf32>
    %cst_90 = arith.constant dense<0.000000e+00> : vector<8x28xf32>
    %404 = tpu.matmul %403, %10, %cst_90 {dimension_numbers = #tpu.dot_dimension_numbers<[1], [0], [0], [1], [0, 0, 1, 1], [], []>} : vector<8x7xf32>, vector<7x28xf32>, vector<8x28xf32> -> vector<8x28xf32>
    %cst_91 = arith.constant dense<0.000000e+00> : vector<8x28xf32>
    %405 = tpu.matmul %373, %11, %cst_91 {dimension_numbers = #tpu.dot_dimension_numbers<[1], [0], [0], [1], [0, 0, 1, 1], [], []>} : vector<8x7xf32>, vector<7x28xf32>, vector<8x28xf32> -> vector<8x28xf32>
    %406 = arith.addf %404, %405 : vector<8x28xf32>
    %407 = vector.broadcast %12 : vector<1x28xf32> to vector<8x28xf32>
    %408 = arith.addf %406, %407 : vector<8x28xf32>
    %409 = vector.extract_strided_slice %408 {offsets = [0, 0], sizes = [8, 7], strides = [1, 1]} : vector<8x28xf32> to vector<8x7xf32>
    %410 = arith.negf %409 : vector<8x7xf32>
    %411 = math.exp %410 : vector<8x7xf32>
    %cst_92 = arith.constant 1.000000e+00 : f32
    %412 = vector.broadcast %cst_92 : f32 to vector<8x7xf32>
    %413 = arith.addf %412, %411 : vector<8x7xf32>
    %414 = arith.divf %412, %413 : vector<8x7xf32>
    %415 = vector.extract_strided_slice %408 {offsets = [0, 7], sizes = [8, 7], strides = [1, 1]} : vector<8x28xf32> to vector<8x7xf32>
    %416 = arith.negf %415 : vector<8x7xf32>
    %417 = math.exp %416 : vector<8x7xf32>
    %cst_93 = arith.constant 1.000000e+00 : f32
    %418 = vector.broadcast %cst_93 : f32 to vector<8x7xf32>
    %419 = arith.addf %418, %417 : vector<8x7xf32>
    %420 = arith.divf %418, %419 : vector<8x7xf32>
    %421 = vector.extract_strided_slice %408 {offsets = [0, 14], sizes = [8, 7], strides = [1, 1]} : vector<8x28xf32> to vector<8x7xf32>
    %422 = math.tanh %421 : vector<8x7xf32>
    %423 = vector.extract_strided_slice %408 {offsets = [0, 21], sizes = [8, 7], strides = [1, 1]} : vector<8x28xf32> to vector<8x7xf32>
    %424 = arith.negf %423 : vector<8x7xf32>
    %425 = math.exp %424 : vector<8x7xf32>
    %cst_94 = arith.constant 1.000000e+00 : f32
    %426 = vector.broadcast %cst_94 : f32 to vector<8x7xf32>
    %427 = arith.addf %426, %425 : vector<8x7xf32>
    %428 = arith.divf %426, %427 : vector<8x7xf32>
    %429 = arith.mulf %420, %371 : vector<8x7xf32>
    %430 = arith.mulf %414, %422 : vector<8x7xf32>
    %431 = arith.addf %429, %430 : vector<8x7xf32>
    %432 = math.tanh %431 : vector<8x7xf32>
    %433 = arith.mulf %428, %432 : vector<8x7xf32>
    %c7_i32 = arith.constant 7 : i32
    %434 = arith.index_cast %c7_i32 : i32 to index
    %c0_95 = arith.constant 0 : index
    %c0_96 = arith.constant 0 : index
    %435 = vector.load %arg9[%434, %c0_95, %c0_96] : memref<8x8x28xf32, #tpu.memory_space<vmem>>, vector<1x8x28xf32>
    %436 = vector.shape_cast %435 : vector<1x8x28xf32> to vector<8x28xf32>
    %cst_97 = arith.constant dense<0.000000e+00> : vector<8x28xf32>
    %437 = tpu.matmul %403, %9, %cst_97 {dimension_numbers = #tpu.dot_dimension_numbers<[1], [0], [0], [1], [0, 0, 1, 1], [], []>} : vector<8x7xf32>, vector<7x28xf32>, vector<8x28xf32> -> vector<8x28xf32>
    %438 = arith.addf %436, %437 : vector<8x28xf32>
    %439 = vector.extract_strided_slice %438 {offsets = [0, 0], sizes = [8, 7], strides = [1, 1]} : vector<8x28xf32> to vector<8x7xf32>
    %440 = arith.negf %439 : vector<8x7xf32>
    %441 = math.exp %440 : vector<8x7xf32>
    %cst_98 = arith.constant 1.000000e+00 : f32
    %442 = vector.broadcast %cst_98 : f32 to vector<8x7xf32>
    %443 = arith.addf %442, %441 : vector<8x7xf32>
    %444 = arith.divf %442, %443 : vector<8x7xf32>
    %445 = vector.extract_strided_slice %438 {offsets = [0, 7], sizes = [8, 7], strides = [1, 1]} : vector<8x28xf32> to vector<8x7xf32>
    %446 = arith.negf %445 : vector<8x7xf32>
    %447 = math.exp %446 : vector<8x7xf32>
    %cst_99 = arith.constant 1.000000e+00 : f32
    %448 = vector.broadcast %cst_99 : f32 to vector<8x7xf32>
    %449 = arith.addf %448, %447 : vector<8x7xf32>
    %450 = arith.divf %448, %449 : vector<8x7xf32>
    %451 = vector.extract_strided_slice %438 {offsets = [0, 14], sizes = [8, 7], strides = [1, 1]} : vector<8x28xf32> to vector<8x7xf32>
    %452 = math.tanh %451 : vector<8x7xf32>
    %453 = vector.extract_strided_slice %438 {offsets = [0, 21], sizes = [8, 7], strides = [1, 1]} : vector<8x28xf32> to vector<8x7xf32>
    %454 = arith.negf %453 : vector<8x7xf32>
    %455 = math.exp %454 : vector<8x7xf32>
    %cst_100 = arith.constant 1.000000e+00 : f32
    %456 = vector.broadcast %cst_100 : f32 to vector<8x7xf32>
    %457 = arith.addf %456, %455 : vector<8x7xf32>
    %458 = arith.divf %456, %457 : vector<8x7xf32>
    %459 = arith.mulf %450, %401 : vector<8x7xf32>
    %460 = arith.mulf %444, %452 : vector<8x7xf32>
    %461 = arith.addf %459, %460 : vector<8x7xf32>
    %462 = math.tanh %461 : vector<8x7xf32>
    %463 = arith.mulf %458, %462 : vector<8x7xf32>
    %cst_101 = arith.constant dense<0.000000e+00> : vector<8x28xf32>
    %464 = tpu.matmul %463, %10, %cst_101 {dimension_numbers = #tpu.dot_dimension_numbers<[1], [0], [0], [1], [0, 0, 1, 1], [], []>} : vector<8x7xf32>, vector<7x28xf32>, vector<8x28xf32> -> vector<8x28xf32>
    %cst_102 = arith.constant dense<0.000000e+00> : vector<8x28xf32>
    %465 = tpu.matmul %433, %11, %cst_102 {dimension_numbers = #tpu.dot_dimension_numbers<[1], [0], [0], [1], [0, 0, 1, 1], [], []>} : vector<8x7xf32>, vector<7x28xf32>, vector<8x28xf32> -> vector<8x28xf32>
    %466 = arith.addf %464, %465 : vector<8x28xf32>
    %467 = vector.broadcast %12 : vector<1x28xf32> to vector<8x28xf32>
    %468 = arith.addf %466, %467 : vector<8x28xf32>
    %469 = vector.extract_strided_slice %468 {offsets = [0, 0], sizes = [8, 7], strides = [1, 1]} : vector<8x28xf32> to vector<8x7xf32>
    %470 = arith.negf %469 : vector<8x7xf32>
    %471 = math.exp %470 : vector<8x7xf32>
    %cst_103 = arith.constant 1.000000e+00 : f32
    %472 = vector.broadcast %cst_103 : f32 to vector<8x7xf32>
    %473 = arith.addf %472, %471 : vector<8x7xf32>
    %474 = arith.divf %472, %473 : vector<8x7xf32>
    %475 = vector.extract_strided_slice %468 {offsets = [0, 7], sizes = [8, 7], strides = [1, 1]} : vector<8x28xf32> to vector<8x7xf32>
    %476 = arith.negf %475 : vector<8x7xf32>
    %477 = math.exp %476 : vector<8x7xf32>
    %cst_104 = arith.constant 1.000000e+00 : f32
    %478 = vector.broadcast %cst_104 : f32 to vector<8x7xf32>
    %479 = arith.addf %478, %477 : vector<8x7xf32>
    %480 = arith.divf %478, %479 : vector<8x7xf32>
    %481 = vector.extract_strided_slice %468 {offsets = [0, 14], sizes = [8, 7], strides = [1, 1]} : vector<8x28xf32> to vector<8x7xf32>
    %482 = math.tanh %481 : vector<8x7xf32>
    %483 = vector.extract_strided_slice %468 {offsets = [0, 21], sizes = [8, 7], strides = [1, 1]} : vector<8x28xf32> to vector<8x7xf32>
    %484 = arith.negf %483 : vector<8x7xf32>
    %485 = math.exp %484 : vector<8x7xf32>
    %cst_105 = arith.constant 1.000000e+00 : f32
    %486 = vector.broadcast %cst_105 : f32 to vector<8x7xf32>
    %487 = arith.addf %486, %485 : vector<8x7xf32>
    %488 = arith.divf %486, %487 : vector<8x7xf32>
    %489 = arith.mulf %480, %431 : vector<8x7xf32>
    %490 = arith.mulf %474, %482 : vector<8x7xf32>
    %491 = arith.addf %489, %490 : vector<8x7xf32>
    %492 = math.tanh %491 : vector<8x7xf32>
    %493 = arith.mulf %488, %492 : vector<8x7xf32>
    %c8_i32 = arith.constant 8 : i32
    %c0_106 = arith.constant 0 : index
    %c0_107 = arith.constant 0 : index
    %494 = vector.load %arg8[%c0_106, %c0_107] : memref<8x7xf32, #tpu.memory_space<vmem>>, vector<8x7xf32>
    tpu.vector_store %arg8[%c0_106, %c0_107], %493 {strides = array<i32>} : memref<8x7xf32, #tpu.memory_space<vmem>>, vector<8x7xf32>,
    return
  }
  func.func @transform_0(%arg0: i32) -> (i32, i32, i32) {
    %c0_i32 = arith.constant 0 : i32
    %c0_i32_0 = arith.constant 0 : i32
    %c0_i32_1 = arith.constant 0 : i32
    return %c0_i32, %arg0, %c0_i32_0 : i32, i32, i32
  }
  func.func @transform_1(%arg0: i32) -> (i32, i32) {
    %c0_i32 = arith.constant 0 : i32
    %c0_i32_0 = arith.constant 0 : i32
    %c0_i32_1 = arith.constant 0 : i32
    return %c0_i32, %c0_i32_0 : i32, i32
  }
  func.func @transform_2(%arg0: i32) -> (i32, i32) {
    %c0_i32 = arith.constant 0 : i32
    %c0_i32_0 = arith.constant 0 : i32
    %c0_i32_1 = arith.constant 0 : i32
    return %c0_i32, %c0_i32_0 : i32, i32
  }
  func.func @transform_3(%arg0: i32) -> (i32, i32) {
    %c0_i32 = arith.constant 0 : i32
    %c0_i32_0 = arith.constant 0 : i32
    %c0_i32_1 = arith.constant 0 : i32
    return %c0_i32, %c0_i32_0 : i32, i32
  }
  func.func @transform_4(%arg0: i32) -> (i32, i32) {
    %c0_i32 = arith.constant 0 : i32
    %c0_i32_0 = arith.constant 0 : i32
    %c0_i32_1 = arith.constant 0 : i32
    return %c0_i32, %c0_i32_0 : i32, i32
  }
  func.func @transform_5(%arg0: i32) -> (i32, i32) {
    %c0_i32 = arith.constant 0 : i32
    %c0_i32_0 = arith.constant 0 : i32
    %c0_i32_1 = arith.constant 0 : i32
    return %c0_i32, %c0_i32_0 : i32, i32
  }
  func.func @transform_6(%arg0: i32) -> (i32, i32) {
    %c0_i32 = arith.constant 0 : i32
    %c0_i32_0 = arith.constant 0 : i32
    %c0_i32_1 = arith.constant 0 : i32
    return %c0_i32, %c0_i32_0 : i32, i32
  }
  func.func @transform_7(%arg0: i32) -> (i32, i32) {
    %c0_i32 = arith.constant 0 : i32
    %c0_i32_0 = arith.constant 0 : i32
    return %arg0, %c0_i32 : i32, i32
  }
}

</mosaic_0001>

<llo_original>
// kernel: tpu_custom_call.1
$region0: #{tpu_custom_call.1}
  #allocation0 [shape = 'u32[]', space=smem, size = 0x4, offset = 0x4, fixed_abs, tag = 'smem constant byte address 0x4 - core index']
  #allocation1 [shape = 'u32[72,128]{1,0:T(1,128)}', space=vmem, size = 0x9000, scoped, tag = 'internal scratch']
  #allocation2 [shape = 'f32[8,8,28]{2,1,0:T(8,128)}', space=vmem, size = 0x8000, scoped, tag = 'scratch operand']
  %s0 = inlined_call_operand.vmem [shape: f32[8,8,60], index: 0, kind: input, shape index: {}]
  %s1 = inlined_call_operand.vmem [shape: f32[60,28], index: 1, kind: input, shape index: {}]
  %s2 = inlined_call_operand.vmem [shape: f32[7,28], index: 2, kind: input, shape index: {}]
  %s3 = inlined_call_operand.vmem [shape: f32[1,28], index: 3, kind: input, shape index: {}]
  %s4 = inlined_call_operand.vmem [shape: f32[7,28], index: 4, kind: input, shape index: {}]
  %s5 = inlined_call_operand.vmem [shape: f32[7,28], index: 5, kind: input, shape index: {}]
  %s6 = inlined_call_operand.vmem [shape: f32[1,28], index: 6, kind: input, shape index: {}]
  %s7 = inlined_call_operand.hbm [shape: f32[8,7], index: 7, kind: output, shape index: {}]
  %s8 = sld [smem:[#allocation0]]
  $region38: #{tpu_custom_call.1} parent=0
    _
  %s10 = ssub.s32 1, %s8
  %s11 = scalar_select 0, %s10, %s8
  $region1: #{tpu_custom_call.1} parent=0
    #allocation3 [shape = 'u8[4096]{0}', space=vmem, size = 0x1000, scoped, tag = 'output window, operand 0, single buffered']
    #allocation4 [shape = 's32[1]{0}', space=sflag, size = 0x4, scoped, tag = 'scoped memory for tpu_custom_call.1']
    %12 = vsyncpa [#allocation4], 0
    // Predicated region
    $region2: #{tpu_custom_call.1} parent=1 // pred_check
      _
    $region3: #{tpu_custom_call.1} parent=1 // pred_check_branch
      %14 = sbr.rel (0) target = $region5
    $region4: #{tpu_custom_call.1} parent=1 // pred_region
      _
    $region5: #{tpu_custom_call.1} parent=1 // pred_fallthru
      _
    // Predicated region
    $region6: #{tpu_custom_call.1} parent=1 // pred_check
      _
    $region7: #{tpu_custom_call.1} parent=1 // pred_check_branch
      %16 = sbr.rel (0) target = $region9
    $region8: #{tpu_custom_call.1} parent=1 // pred_region
      _
    $region9: #{tpu_custom_call.1} parent=1 // pred_fallthru
      _
    // Predicated region
    $region10: #{tpu_custom_call.1} parent=1 // pred_check
      _
    $region11: #{tpu_custom_call.1} parent=1 // pred_check_branch
      %18 = sbr.rel (0) target = $region13
    $region12: #{tpu_custom_call.1} parent=1 // pred_region
      _
    $region13: #{tpu_custom_call.1} parent=1 // pred_fallthru
      _
    // Predicated region
    $region14: #{tpu_custom_call.1} parent=1 // pred_check
      _
    $region15: #{tpu_custom_call.1} parent=1 // pred_check_branch
      %20 = sbr.rel (0) target = $region17
    $region16: #{tpu_custom_call.1} parent=1 // pred_region
      _
    $region17: #{tpu_custom_call.1} parent=1 // pred_fallthru
      _
    // Predicated region
    $region18: #{tpu_custom_call.1} parent=1 // pred_check
      _
    $region19: #{tpu_custom_call.1} parent=1 // pred_check_branch
      %22 = sbr.rel (0) target = $region21
    $region20: #{tpu_custom_call.1} parent=1 // pred_region
      _
    $region21: #{tpu_custom_call.1} parent=1 // pred_fallthru
      _
    // Predicated region
    $region22: #{tpu_custom_call.1} parent=1 // pred_check
      _
    $region23: #{tpu_custom_call.1} parent=1 // pred_check_branch
      %24 = sbr.rel (0) target = $region25
    $region24: #{tpu_custom_call.1} parent=1 // pred_region
      _
    $region25: #{tpu_custom_call.1} parent=1 // pred_fallthru
      _
    // Predicated region
    $region26: #{tpu_custom_call.1} parent=1 // pred_check
      _
    $region27: #{tpu_custom_call.1} parent=1 // pred_check_branch
      %26 = sbr.rel (0) target = $region29
    $region28: #{tpu_custom_call.1} parent=1 // pred_region
      _
    $region29: #{tpu_custom_call.1} parent=1 // pred_fallthru
      _
    %v27 = vld [vmem:[%s0] sm:$0xff]
    %v28 = vld [vmem:[%s0 + $0x8] sm:$0xff]
    %v29 = vld [vmem:[%s0 + $0x10] sm:$0xff]
    %v30 = vld [vmem:[%s0 + $0x18] sm:$0xff]
    %v31 = vld [vmem:[%s0 + $0x20] sm:$0xff]
    %v32 = vld [vmem:[%s0 + $0x28] sm:$0xff]
    %v33 = vld [vmem:[%s0 + $0x30] sm:$0xff]
    %v34 = vld [vmem:[%s0 + $0x38] sm:$0xff]
    %v35 = vld [vmem:[%s1] sm:$0xff]
    %v36 = vld [vmem:[%s1 + $0x8] sm:$0xff]
    %v37 = vld [vmem:[%s1 + $0x10] sm:$0xff]
    %v38 = vld [vmem:[%s1 + $0x18] sm:$0xff]
    %v39 = vld [vmem:[%s1 + $0x20] sm:$0xff]
    %v40 = vld [vmem:[%s1 + $0x28] sm:$0xff]
    %v41 = vld [vmem:[%s1 + $0x30] sm:$0xff]
    %v42 = vld [vmem:[%s1 + $0x38] sm:$0xf]
    %v43 = vld [vmem:[%s3] sm:$0x1]
    %v45 = vperm.slane %v43, 0
    %vm47 = vcmask 490496
    %v49 = vsel %vm47, %v27, 0
    %v52 = vsel %vm47, %v28, 0
    %v55 = vsel %vm47, %v29, 0
    %v58 = vsel %vm47, %v30, 0
    %v61 = vsel %vm47, %v31, 0
    %v64 = vsel %vm47, %v32, 0
    %v67 = vsel %vm47, %v33, 0
    %v70 = vsel %vm47, %v34, 0
    %vm72 = vcmask 1043456
    %v74 = vsel %vm72, %v42, 0
    %76 = vmatpush.msra.mxu0 0.0
    %77 = vmatpush.msra.mxu0 0.0
    %78 = vmatpush.msra.mxu0 0.0
    %79 = vmatpush.msra.mxu0 0.0
    %80 = vmatpush.msra.mxu0 0.0
    %81 = vmatpush.msra.mxu0 0.0
    %82 = vmatpush.msra.mxu0 0.0
    %83 = vmatpush.msra.mxu0 0.0
    %84 = vmatpush.msra.mxu0 %v74
    %85 = vmatpush.msra.mxu0 %v41
    %86 = vmatpush.msra.mxu0 %v40
    %87 = vmatpush.msra.mxu0 %v39
    %88 = vmatpush.msra.mxu0 %v38
    %89 = vmatpush.msra.mxu0 %v37
    %90 = vmatpush.msra.mxu0 %v36
    %91 = vmatpush.msra.mxu0 %v35
    %92 = vmatmul.f32.gmra.mxu0 %v49
    %v93 = vpop.f32.mrf.mxu0
    %v94 = vadd.f32 %v45, %v93
    %95 = vmatmul.f32.gmra.mxu0 %v52
    %v96 = vpop.f32.mrf.mxu0
    %v97 = vadd.f32 %v45, %v96
    %98 = vmatmul.f32.gmra.mxu0 %v55
    %v99 = vpop.f32.mrf.mxu0
    %v100 = vadd.f32 %v45, %v99
    %101 = vmatmul.f32.gmra.mxu0 %v58
    %v102 = vpop.f32.mrf.mxu0
    %v103 = vadd.f32 %v45, %v102
    %104 = vmatmul.f32.gmra.mxu0 %v61
    %v105 = vpop.f32.mrf.mxu0
    %v106 = vadd.f32 %v45, %v105
    %107 = vmatmul.f32.gmra.mxu0 %v64
    %v108 = vpop.f32.mrf.mxu0
    %v109 = vadd.f32 %v45, %v108
    %110 = vmatmul.f32.gmra.mxu0 %v67
    %v111 = vpop.f32.mrf.mxu0
    %v112 = vadd.f32 %v45, %v111
    %113 = vmatmul.f32.gmra.mxu0 %v70
    %v114 = vpop.f32.mrf.mxu0
    %v115 = vadd.f32 %v45, %v114
    %116 = vdwg.mxu0
    %vm117 = vcmask 228352
    %118 = vst.msk [vmem:[#allocation2] sm:$0xff] %vm117, %v94
    %119 = vst.msk [vmem:[#allocation2 + $0x8] sm:$0xff] %vm117, %v97
    %120 = vst.msk [vmem:[#allocation2 + $0x10] sm:$0xff] %vm117, %v100
    %121 = vst.msk [vmem:[#allocation2 + $0x18] sm:$0xff] %vm117, %v103
    %122 = vst.msk [vmem:[#allocation2 + $0x20] sm:$0xff] %vm117, %v106
    %123 = vst.msk [vmem:[#allocation2 + $0x28] sm:$0xff] %vm117, %v109
    %124 = vst.msk [vmem:[#allocation2 + $0x30] sm:$0xff] %vm117, %v112
    %125 = vst.msk [vmem:[#allocation2 + $0x38] sm:$0xff] %vm117, %v115
    %v126 = vld [vmem:[%s2] sm:$0x7f]
    %v127 = vld [vmem:[%s4] sm:$0x7f]
    %v128 = vld [vmem:[%s5] sm:$0x7f]
    %v129 = vld [vmem:[%s6] sm:$0x1]
    %v130 = vld [vmem:[#allocation2] sm:$0xff]
    %vm131 = vcmask 56320
    %v133 = vsel %vm131, 0.0, 0
    %vm135 = vcmask 1046528
    %v137 = vsel %vm135, %v126, 0
    %139 = vmatpush.msra.mxu0 0.0
    %140 = vmatpush.msra.mxu0 0.0
    %141 = vmatpush.msra.mxu0 0.0
    %142 = vmatpush.msra.mxu0 0.0
    %143 = vmatpush.msra.mxu0 0.0
    %144 = vmatpush.msra.mxu0 0.0
    %145 = vmatpush.msra.mxu0 0.0
    %146 = vmatpush.msra.mxu0 0.0
    %147 = vmatpush.msra.mxu0 0.0
    %148 = vmatpush.msra.mxu0 0.0
    %149 = vmatpush.msra.mxu0 0.0
    %150 = vmatpush.msra.mxu0 0.0
    %151 = vmatpush.msra.mxu0 0.0
    %152 = vmatpush.msra.mxu0 0.0
    %153 = vmatpush.msra.mxu0 0.0
    %154 = vmatpush.msra.mxu0 %v137
    %155 = vmatmul.f32.gmra.mxu0 %v133
    %v156 = vpop.f32.mrf.mxu0
    %v157 = vadd.f32 0.0, %v156
    %158 = vdwg.mxu0
    %v159 = vadd.f32 %v130, %v157
    %v160 = vxor.u32 %v159, 2147483648
    %v161 = vmul.f32 %v160, 1.442695
    %v162 = vpow.pop %v161
    %v163 = vadd.f32 %v162, 1.0
    %v164 = vrcp.pop %v163
    %v165 = vmul.f32 %v163, %v164
    %v166 = vsub.f32 1.0, %v165
    %v167 = vmul.f32 %v164, %v166
    %v168 = vadd.f32 %v164, %v167
    %vm169 = vweird.f32 %v163
    %vm170 = vweird.f32 %v164
    %vm171 = vmor %vm169, %vm170
    %v172 = vsel %vm171, %v164, %v168
    %v173 = vand.u32 2147483647, %v163
    %vm174 = vcmp.eq.f32.partialorder %v173, 8.507059e+37
    %v175 = vand.u32 %v163, 2147483648
    %v176 = vor.u32 1.1754944e-38, %v175
    %v177 = vsel %vm174, %v176, %v172
    %v178 = vmul.f32 1.0, %v177
    %v179 = vtanh.pop %v159
    %v180 = vmul.f32 %v178, 0.0
    %182 = vrot.lane.b32.xlu0 %v179, 114
    %v183 = vpop.permute.xlu0 %182
    %v185 = vmul.f32 %v178, %v183
    %187 = vrot.lane.b32.xlu0 %v185, 7
    %v188 = vpop.permute.xlu0 %187
    %v190 = vadd.f32 %v180, %v188
    %v191 = vtanh.pop %v190
    %193 = vrot.lane.b32.xlu0 %v191, 14
    %v194 = vpop.permute.xlu0 %193
    %v196 = vmul.f32 %v178, %v194
    %v198 = vsel %vm135, %v128, 0
    %200 = vmatpush.msra.mxu0 0.0
    %201 = vmatpush.msra.mxu0 0.0
    %202 = vmatpush.msra.mxu0 0.0
    %203 = vmatpush.msra.mxu0 0.0
    %204 = vmatpush.msra.mxu0 0.0
    %205 = vmatpush.msra.mxu0 0.0
    %206 = vmatpush.msra.mxu0 0.0
    %207 = vmatpush.msra.mxu0 0.0
    %208 = vmatpush.msra.mxu0 0.0
    %209 = vmatpush.msra.mxu0 0.0
    %210 = vmatpush.msra.mxu0 0.0
    %211 = vmatpush.msra.mxu0 0.0
    %212 = vmatpush.msra.mxu0 0.0
    %213 = vmatpush.msra.mxu0 0.0
    %214 = vmatpush.msra.mxu0 0.0
    %215 = vmatpush.msra.mxu0 %v198
    %216 = vmatmul.f32.gmra.mxu0 %v133
    %v217 = vpop.f32.mrf.mxu0
    %v218 = vadd.f32 0.0, %v217
    %219 = vdwg.mxu0
    %221 = vrot.lane.b32.xlu0 %v196, 107
    %v222 = vpop.permute.xlu0 %221
    %v223 = vsel %vm131, %v222, 0
    %v226 = vsel %vm135, %v127, 0
    %228 = vmatpush.msra.mxu0 0.0
    %229 = vmatpush.msra.mxu0 0.0
    %230 = vmatpush.msra.mxu0 0.0
    %231 = vmatpush.msra.mxu0 0.0
    %232 = vmatpush.msra.mxu0 0.0
    %233 = vmatpush.msra.mxu0 0.0
    %234 = vmatpush.msra.mxu0 0.0
    %235 = vmatpush.msra.mxu0 0.0
    %236 = vmatpush.msra.mxu0 0.0
    %237 = vmatpush.msra.mxu0 0.0
    %238 = vmatpush.msra.mxu0 0.0
    %239 = vmatpush.msra.mxu0 0.0
    %240 = vmatpush.msra.mxu0 0.0
    %241 = vmatpush.msra.mxu0 0.0
    %242 = vmatpush.msra.mxu0 0.0
    %243 = vmatpush.msra.mxu0 %v226
    %244 = vmatmul.f32.gmra.mxu0 %v223
    %v245 = vpop.f32.mrf.mxu0
    %v246 = vadd.f32 %v218, %v245
    %247 = vdwg.mxu0
    %v249 = vperm.slane %v129, 0
    %v251 = vadd.f32 %v246, %v249
    %v252 = vxor.u32 %v251, 2147483648
    %v253 = vmul.f32 %v252, 1.442695
    %v254 = vpow.pop %v253
    %v255 = vadd.f32 %v254, 1.0
    %v256 = vrcp.pop %v255
    %v257 = vmul.f32 %v255, %v256
    %v258 = vsub.f32 1.0, %v257
    %v259 = vmul.f32 %v256, %v258
    %v260 = vadd.f32 %v256, %v259
    %vm261 = vweird.f32 %v255
    %vm262 = vweird.f32 %v256
    %vm263 = vmor %vm261, %vm262
    %v264 = vsel %vm263, %v256, %v260
    %v265 = vand.u32 2147483647, %v255
    %vm266 = vcmp.eq.f32.partialorder %v265, 8.507059e+37
    %v267 = vand.u32 %v255, 2147483648
    %v268 = vor.u32 1.1754944e-38, %v267
    %v269 = vsel %vm266, %v268, %v264
    %v270 = vmul.f32 1.0, %v269
    %v271 = vtanh.pop %v251
    %v272 = vmul.f32 %v270, 0.0
    %274 = vrot.lane.b32.xlu0 %v271, 114
    %v275 = vpop.permute.xlu0 %274
    %v277 = vmul.f32 %v270, %v275
    %279 = vrot.lane.b32.xlu0 %v277, 7
    %v280 = vpop.permute.xlu0 %279
    %v282 = vadd.f32 %v272, %v280
    %v283 = vtanh.pop %v282
    %285 = vrot.lane.b32.xlu0 %v283, 14
    %v286 = vpop.permute.xlu0 %285
    %v288 = vmul.f32 %v270, %v286
    %s289 = scalar_lea.vmem [#allocation2], 8
    %v290 = vld [vmem:[%s289] sm:$0xff]
    %291 = vmatpush.msra.mxu0 0.0
    %292 = vmatpush.msra.mxu0 0.0
    %293 = vmatpush.msra.mxu0 0.0
    %294 = vmatpush.msra.mxu0 0.0
    %295 = vmatpush.msra.mxu0 0.0
    %296 = vmatpush.msra.mxu0 0.0
    %297 = vmatpush.msra.mxu0 0.0
    %298 = vmatpush.msra.mxu0 0.0
    %299 = vmatpush.msra.mxu0 0.0
    %300 = vmatpush.msra.mxu0 0.0
    %301 = vmatpush.msra.mxu0 0.0
    %302 = vmatpush.msra.mxu0 0.0
    %303 = vmatpush.msra.mxu0 0.0
    %304 = vmatpush.msra.mxu0 0.0
    %305 = vmatpush.msra.mxu0 0.0
    %306 = vmatpush.msra.mxu0 %v137
    %307 = vmatmul.f32.gmra.mxu0 %v223
    %v308 = vpop.f32.mrf.mxu0
    %v309 = vadd.f32 0.0, %v308
    %310 = vdwg.mxu0
    %v311 = vadd.f32 %v290, %v309
    %v312 = vxor.u32 %v311, 2147483648
    %v313 = vmul.f32 %v312, 1.442695
    %v314 = vpow.pop %v313
    %v315 = vadd.f32 %v314, 1.0
    %v316 = vrcp.pop %v315
    %v317 = vmul.f32 %v315, %v316
    %v318 = vsub.f32 1.0, %v317
    %v319 = vmul.f32 %v316, %v318
    %v320 = vadd.f32 %v316, %v319
    %vm321 = vweird.f32 %v315
    %vm322 = vweird.f32 %v316
    %vm323 = vmor %vm321, %vm322
    %v324 = vsel %vm323, %v316, %v320
    %v325 = vand.u32 2147483647, %v315
    %vm326 = vcmp.eq.f32.partialorder %v325, 8.507059e+37
    %v327 = vand.u32 %v315, 2147483648
    %v328 = vor.u32 1.1754944e-38, %v327
    %v329 = vsel %vm326, %v328, %v324
    %v330 = vmul.f32 1.0, %v329
    %v331 = vtanh.pop %v311
    %v332 = vmul.f32 %v330, %v190
    %334 = vrot.lane.b32.xlu0 %v331, 114
    %v335 = vpop.permute.xlu0 %334
    %v337 = vmul.f32 %v330, %v335
    %339 = vrot.lane.b32.xlu0 %v337, 7
    %v340 = vpop.permute.xlu0 %339
    %v342 = vadd.f32 %v332, %v340
    %v343 = vtanh.pop %v342
    %345 = vrot.lane.b32.xlu0 %v343, 14
    %v346 = vpop.permute.xlu0 %345
    %v348 = vmul.f32 %v330, %v346
    %350 = vrot.lane.b32.xlu0 %v288, 107
    %v351 = vpop.permute.xlu0 %350
    %v352 = vsel %vm131, %v351, 0
    %354 = vmatpush.msra.mxu0 0.0
    %355 = vmatpush.msra.mxu0 0.0
    %356 = vmatpush.msra.mxu0 0.0
    %357 = vmatpush.msra.mxu0 0.0
    %358 = vmatpush.msra.mxu0 0.0
    %359 = vmatpush.msra.mxu0 0.0
    %360 = vmatpush.msra.mxu0 0.0
    %361 = vmatpush.msra.mxu0 0.0
    %362 = vmatpush.msra.mxu0 0.0
    %363 = vmatpush.msra.mxu0 0.0
    %364 = vmatpush.msra.mxu0 0.0
    %365 = vmatpush.msra.mxu0 0.0
    %366 = vmatpush.msra.mxu0 0.0
    %367 = vmatpush.msra.mxu0 0.0
    %368 = vmatpush.msra.mxu0 0.0
    %369 = vmatpush.msra.mxu0 %v198
    %370 = vmatmul.f32.gmra.mxu0 %v352
    %v371 = vpop.f32.mrf.mxu0
    %v372 = vadd.f32 0.0, %v371
    %373 = vdwg.mxu0
    %375 = vrot.lane.b32.xlu0 %v348, 107
    %v376 = vpop.permute.xlu0 %375
    %v377 = vsel %vm131, %v376, 0
    %379 = vmatpush.msra.mxu0 0.0
    %380 = vmatpush.msra.mxu0 0.0
    %381 = vmatpush.msra.mxu0 0.0
    %382 = vmatpush.msra.mxu0 0.0
    %383 = vmatpush.msra.mxu0 0.0
    %384 = vmatpush.msra.mxu0 0.0
    %385 = vmatpush.msra.mxu0 0.0
    %386 = vmatpush.msra.mxu0 0.0
    %387 = vmatpush.msra.mxu0 0.0
    %388 = vmatpush.msra.mxu0 0.0
    %389 = vmatpush.msra.mxu0 0.0
    %390 = vmatpush.msra.mxu0 0.0
    %391 = vmatpush.msra.mxu0 0.0
    %392 = vmatpush.msra.mxu0 0.0
    %393 = vmatpush.msra.mxu0 0.0
    %394 = vmatpush.msra.mxu0 %v226
    %395 = vmatmul.f32.gmra.mxu0 %v377
    %v396 = vpop.f32.mrf.mxu0
    %v397 = vadd.f32 %v372, %v396
    %398 = vdwg.mxu0
    %v399 = vadd.f32 %v397, %v249
    %v400 = vxor.u32 %v399, 2147483648
    %v401 = vmul.f32 %v400, 1.442695
    %v402 = vpow.pop %v401
    %v403 = vadd.f32 %v402, 1.0
    %v404 = vrcp.pop %v403
    %v405 = vmul.f32 %v403, %v404
    %v406 = vsub.f32 1.0, %v405
    %v407 = vmul.f32 %v404, %v406
    %v408 = vadd.f32 %v404, %v407
    %vm409 = vweird.f32 %v403
    %vm410 = vweird.f32 %v404
    %vm411 = vmor %vm409, %vm410
    %v412 = vsel %vm411, %v404, %v408
    %v413 = vand.u32 2147483647, %v403
    %vm414 = vcmp.eq.f32.partialorder %v413, 8.507059e+37
    %v415 = vand.u32 %v403, 2147483648
    %v416 = vor.u32 1.1754944e-38, %v415
    %v417 = vsel %vm414, %v416, %v412
    %v418 = vmul.f32 1.0, %v417
    %v419 = vtanh.pop %v399
    %v420 = vmul.f32 %v418, %v282
    %422 = vrot.lane.b32.xlu0 %v419, 114
    %v423 = vpop.permute.xlu0 %422
    %v425 = vmul.f32 %v418, %v423
    %427 = vrot.lane.b32.xlu0 %v425, 7
    %v428 = vpop.permute.xlu0 %427
    %v430 = vadd.f32 %v420, %v428
    %v431 = vtanh.pop %v430
    %433 = vrot.lane.b32.xlu0 %v431, 14
    %v434 = vpop.permute.xlu0 %433
    %v436 = vmul.f32 %v418, %v434
    %s437 = scalar_lea.vmem [#allocation2], 16
    %v438 = vld [vmem:[%s437] sm:$0xff]
    %439 = vmatpush.msra.mxu0 0.0
    %440 = vmatpush.msra.mxu0 0.0
    %441 = vmatpush.msra.mxu0 0.0
    %442 = vmatpush.msra.mxu0 0.0
    %443 = vmatpush.msra.mxu0 0.0
    %444 = vmatpush.msra.mxu0 0.0
    %445 = vmatpush.msra.mxu0 0.0
    %446 = vmatpush.msra.mxu0 0.0
    %447 = vmatpush.msra.mxu0 0.0
    %448 = vmatpush.msra.mxu0 0.0
    %449 = vmatpush.msra.mxu0 0.0
    %450 = vmatpush.msra.mxu0 0.0
    %451 = vmatpush.msra.mxu0 0.0
    %452 = vmatpush.msra.mxu0 0.0
    %453 = vmatpush.msra.mxu0 0.0
    %454 = vmatpush.msra.mxu0 %v137
    %455 = vmatmul.f32.gmra.mxu0 %v377
    %v456 = vpop.f32.mrf.mxu0
    %v457 = vadd.f32 0.0, %v456
    %458 = vdwg.mxu0
    %v459 = vadd.f32 %v438, %v457
    %v460 = vxor.u32 %v459, 2147483648
    %v461 = vmul.f32 %v460, 1.442695
    %v462 = vpow.pop %v461
    %v463 = vadd.f32 %v462, 1.0
    %v464 = vrcp.pop %v463
    %v465 = vmul.f32 %v463, %v464
    %v466 = vsub.f32 1.0, %v465
    %v467 = vmul.f32 %v464, %v466
    %v468 = vadd.f32 %v464, %v467
    %vm469 = vweird.f32 %v463
    %vm470 = vweird.f32 %v464
    %vm471 = vmor %vm469, %vm470
    %v472 = vsel %vm471, %v464, %v468
    %v473 = vand.u32 2147483647, %v463
    %vm474 = vcmp.eq.f32.partialorder %v473, 8.507059e+37
    %v475 = vand.u32 %v463, 2147483648
    %v476 = vor.u32 1.1754944e-38, %v475
    %v477 = vsel %vm474, %v476, %v472
    %v478 = vmul.f32 1.0, %v477
    %v479 = vtanh.pop %v459
    %v480 = vmul.f32 %v478, %v342
    %482 = vrot.lane.b32.xlu0 %v479, 114
    %v483 = vpop.permute.xlu0 %482
    %v485 = vmul.f32 %v478, %v483
    %487 = vrot.lane.b32.xlu0 %v485, 7
    %v488 = vpop.permute.xlu0 %487
    %v490 = vadd.f32 %v480, %v488
    %v491 = vtanh.pop %v490
    %493 = vrot.lane.b32.xlu0 %v491, 14
    %v494 = vpop.permute.xlu0 %493
    %v496 = vmul.f32 %v478, %v494
    %498 = vrot.lane.b32.xlu0 %v436, 107
    %v499 = vpop.permute.xlu0 %498
    %v500 = vsel %vm131, %v499, 0
    %502 = vmatpush.msra.mxu0 0.0
    %503 = vmatpush.msra.mxu0 0.0
    %504 = vmatpush.msra.mxu0 0.0
    %505 = vmatpush.msra.mxu0 0.0
    %506 = vmatpush.msra.mxu0 0.0
    %507 = vmatpush.msra.mxu0 0.0
    %508 = vmatpush.msra.mxu0 0.0
    %509 = vmatpush.msra.mxu0 0.0
    %510 = vmatpush.msra.mxu0 0.0
    %511 = vmatpush.msra.mxu0 0.0
    %512 = vmatpush.msra.mxu0 0.0
    %513 = vmatpush.msra.mxu0 0.0
    %514 = vmatpush.msra.mxu0 0.0
    %515 = vmatpush.msra.mxu0 0.0
    %516 = vmatpush.msra.mxu0 0.0
    %517 = vmatpush.msra.mxu0 %v198
    %518 = vmatmul.f32.gmra.mxu0 %v500
    %v519 = vpop.f32.mrf.mxu0
    %v520 = vadd.f32 0.0, %v519
    %521 = vdwg.mxu0
    %523 = vrot.lane.b32.xlu0 %v496, 107
    %v524 = vpop.permute.xlu0 %523
    %v525 = vsel %vm131, %v524, 0
    %527 = vmatpush.msra.mxu0 0.0
    %528 = vmatpush.msra.mxu0 0.0
    %529 = vmatpush.msra.mxu0 0.0
    %530 = vmatpush.msra.mxu0 0.0
    %531 = vmatpush.msra.mxu0 0.0
    %532 = vmatpush.msra.mxu0 0.0
    %533 = vmatpush.msra.mxu0 0.0
    %534 = vmatpush.msra.mxu0 0.0
    %535 = vmatpush.msra.mxu0 0.0
    %536 = vmatpush.msra.mxu0 0.0
    %537 = vmatpush.msra.mxu0 0.0
    %538 = vmatpush.msra.mxu0 0.0
    %539 = vmatpush.msra.mxu0 0.0
    %540 = vmatpush.msra.mxu0 0.0
    %541 = vmatpush.msra.mxu0 0.0
    %542 = vmatpush.msra.mxu0 %v226
    %543 = vmatmul.f32.gmra.mxu0 %v525
    %v544 = vpop.f32.mrf.mxu0
    %v545 = vadd.f32 %v520, %v544
    %546 = vdwg.mxu0
    %v547 = vadd.f32 %v545, %v249
    %v548 = vxor.u32 %v547, 2147483648
    %v549 = vmul.f32 %v548, 1.442695
    %v550 = vpow.pop %v549
    %v551 = vadd.f32 %v550, 1.0
    %v552 = vrcp.pop %v551
    %v553 = vmul.f32 %v551, %v552
    %v554 = vsub.f32 1.0, %v553
    %v555 = vmul.f32 %v552, %v554
    %v556 = vadd.f32 %v552, %v555
    %vm557 = vweird.f32 %v551
    %vm558 = vweird.f32 %v552
    %vm559 = vmor %vm557, %vm558
    %v560 = vsel %vm559, %v552, %v556
    %v561 = vand.u32 2147483647, %v551
    %vm562 = vcmp.eq.f32.partialorder %v561, 8.507059e+37
    %v563 = vand.u32 %v551, 2147483648
    %v564 = vor.u32 1.1754944e-38, %v563
    %v565 = vsel %vm562, %v564, %v560
    %v566 = vmul.f32 1.0, %v565
    %v567 = vtanh.pop %v547
    %v568 = vmul.f32 %v566, %v430
    %570 = vrot.lane.b32.xlu0 %v567, 114
    %v571 = vpop.permute.xlu0 %570
    %v573 = vmul.f32 %v566, %v571
    %575 = vrot.lane.b32.xlu0 %v573, 7
    %v576 = vpop.permute.xlu0 %575
    %v578 = vadd.f32 %v568, %v576
    %v579 = vtanh.pop %v578
    %581 = vrot.lane.b32.xlu0 %v579, 14
    %v582 = vpop.permute.xlu0 %581
    %v584 = vmul.f32 %v566, %v582
    %s585 = scalar_lea.vmem [#allocation2], 24
    %v586 = vld [vmem:[%s585] sm:$0xff]
    %587 = vmatpush.msra.mxu0 0.0
    %588 = vmatpush.msra.mxu0 0.0
    %589 = vmatpush.msra.mxu0 0.0
    %590 = vmatpush.msra.mxu0 0.0
    %591 = vmatpush.msra.mxu0 0.0
    %592 = vmatpush.msra.mxu0 0.0
    %593 = vmatpush.msra.mxu0 0.0
    %594 = vmatpush.msra.mxu0 0.0
    %595 = vmatpush.msra.mxu0 0.0
    %596 = vmatpush.msra.mxu0 0.0
    %597 = vmatpush.msra.mxu0 0.0
    %598 = vmatpush.msra.mxu0 0.0
    %599 = vmatpush.msra.mxu0 0.0
    %600 = vmatpush.msra.mxu0 0.0
    %601 = vmatpush.msra.mxu0 0.0
    %602 = vmatpush.msra.mxu0 %v137
    %603 = vmatmul.f32.gmra.mxu0 %v525
    %v604 = vpop.f32.mrf.mxu0
    %v605 = vadd.f32 0.0, %v604
    %606 = vdwg.mxu0
    %v607 = vadd.f32 %v586, %v605
    %v608 = vxor.u32 %v607, 2147483648
    %v609 = vmul.f32 %v608, 1.442695
    %v610 = vpow.pop %v609
    %v611 = vadd.f32 %v610, 1.0
    %v612 = vrcp.pop %v611
    %v613 = vmul.f32 %v611, %v612
    %v614 = vsub.f32 1.0, %v613
    %v615 = vmul.f32 %v612, %v614
    %v616 = vadd.f32 %v612, %v615
    %vm617 = vweird.f32 %v611
    %vm618 = vweird.f32 %v612
    %vm619 = vmor %vm617, %vm618
    %v620 = vsel %vm619, %v612, %v616
    %v621 = vand.u32 2147483647, %v611
    %vm622 = vcmp.eq.f32.partialorder %v621, 8.507059e+37
    %v623 = vand.u32 %v611, 2147483648
    %v624 = vor.u32 1.1754944e-38, %v623
    %v625 = vsel %vm622, %v624, %v620
    %v626 = vmul.f32 1.0, %v625
    %v627 = vtanh.pop %v607
    %v628 = vmul.f32 %v626, %v490
    %630 = vrot.lane.b32.xlu0 %v627, 114
    %v631 = vpop.permute.xlu0 %630
    %v633 = vmul.f32 %v626, %v631
    %635 = vrot.lane.b32.xlu0 %v633, 7
    %v636 = vpop.permute.xlu0 %635
    %v638 = vadd.f32 %v628, %v636
    %v639 = vtanh.pop %v638
    %641 = vrot.lane.b32.xlu0 %v639, 14
    %v642 = vpop.permute.xlu0 %641
    %v644 = vmul.f32 %v626, %v642
    %646 = vrot.lane.b32.xlu0 %v584, 107
    %v647 = vpop.permute.xlu0 %646
    %v648 = vsel %vm131, %v647, 0
    %650 = vmatpush.msra.mxu0 0.0
    %651 = vmatpush.msra.mxu0 0.0
    %652 = vmatpush.msra.mxu0 0.0
    %653 = vmatpush.msra.mxu0 0.0
    %654 = vmatpush.msra.mxu0 0.0
    %655 = vmatpush.msra.mxu0 0.0
    %656 = vmatpush.msra.mxu0 0.0
    %657 = vmatpush.msra.mxu0 0.0
    %658 = vmatpush.msra.mxu0 0.0
    %659 = vmatpush.msra.mxu0 0.0
    %660 = vmatpush.msra.mxu0 0.0
    %661 = vmatpush.msra.mxu0 0.0
    %662 = vmatpush.msra.mxu0 0.0
    %663 = vmatpush.msra.mxu0 0.0
    %664 = vmatpush.msra.mxu0 0.0
    %665 = vmatpush.msra.mxu0 %v198
    %666 = vmatmul.f32.gmra.mxu0 %v648
    %v667 = vpop.f32.mrf.mxu0
    %v668 = vadd.f32 0.0, %v667
    %669 = vdwg.mxu0
    %671 = vrot.lane.b32.xlu0 %v644, 107
    %v672 = vpop.permute.xlu0 %671
    %v673 = vsel %vm131, %v672, 0
    %675 = vmatpush.msra.mxu0 0.0
    %676 = vmatpush.msra.mxu0 0.0
    %677 = vmatpush.msra.mxu0 0.0
    %678 = vmatpush.msra.mxu0 0.0
    %679 = vmatpush.msra.mxu0 0.0
    %680 = vmatpush.msra.mxu0 0.0
    %681 = vmatpush.msra.mxu0 0.0
    %682 = vmatpush.msra.mxu0 0.0
    %683 = vmatpush.msra.mxu0 0.0
    %684 = vmatpush.msra.mxu0 0.0
    %685 = vmatpush.msra.mxu0 0.0
    %686 = vmatpush.msra.mxu0 0.0
    %687 = vmatpush.msra.mxu0 0.0
    %688 = vmatpush.msra.mxu0 0.0
    %689 = vmatpush.msra.mxu0 0.0
    %690 = vmatpush.msra.mxu0 %v226
    %691 = vmatmul.f32.gmra.mxu0 %v673
    %v692 = vpop.f32.mrf.mxu0
    %v693 = vadd.f32 %v668, %v692
    %694 = vdwg.mxu0
    %v695 = vadd.f32 %v693, %v249
    %v696 = vxor.u32 %v695, 2147483648
    %v697 = vmul.f32 %v696, 1.442695
    %v698 = vpow.pop %v697
    %v699 = vadd.f32 %v698, 1.0
    %v700 = vrcp.pop %v699
    %v701 = vmul.f32 %v699, %v700
    %v702 = vsub.f32 1.0, %v701
    %v703 = vmul.f32 %v700, %v702
    %v704 = vadd.f32 %v700, %v703
    %vm705 = vweird.f32 %v699
    %vm706 = vweird.f32 %v700
    %vm707 = vmor %vm705, %vm706
    %v708 = vsel %vm707, %v700, %v704
    %v709 = vand.u32 2147483647, %v699
    %vm710 = vcmp.eq.f32.partialorder %v709, 8.507059e+37
    %v711 = vand.u32 %v699, 2147483648
    %v712 = vor.u32 1.1754944e-38, %v711
    %v713 = vsel %vm710, %v712, %v708
    %v714 = vmul.f32 1.0, %v713
    %v715 = vtanh.pop %v695
    %v716 = vmul.f32 %v714, %v578
    %718 = vrot.lane.b32.xlu0 %v715, 114
    %v719 = vpop.permute.xlu0 %718
    %v721 = vmul.f32 %v714, %v719
    %723 = vrot.lane.b32.xlu0 %v721, 7
    %v724 = vpop.permute.xlu0 %723
    %v726 = vadd.f32 %v716, %v724
    %v727 = vtanh.pop %v726
    %729 = vrot.lane.b32.xlu0 %v727, 14
    %v730 = vpop.permute.xlu0 %729
    %v732 = vmul.f32 %v714, %v730
    %s733 = scalar_lea.vmem [#allocation2], 32
    %v734 = vld [vmem:[%s733] sm:$0xff]
    %735 = vmatpush.msra.mxu0 0.0
    %736 = vmatpush.msra.mxu0 0.0
    %737 = vmatpush.msra.mxu0 0.0
    %738 = vmatpush.msra.mxu0 0.0
    %739 = vmatpush.msra.mxu0 0.0
    %740 = vmatpush.msra.mxu0 0.0
    %741 = vmatpush.msra.mxu0 0.0
    %742 = vmatpush.msra.mxu0 0.0
    %743 = vmatpush.msra.mxu0 0.0
    %744 = vmatpush.msra.mxu0 0.0
    %745 = vmatpush.msra.mxu0 0.0
    %746 = vmatpush.msra.mxu0 0.0
    %747 = vmatpush.msra.mxu0 0.0
    %748 = vmatpush.msra.mxu0 0.0
    %749 = vmatpush.msra.mxu0 0.0
    %750 = vmatpush.msra.mxu0 %v137
    %751 = vmatmul.f32.gmra.mxu0 %v673
    %v752 = vpop.f32.mrf.mxu0
    %v753 = vadd.f32 0.0, %v752
    %754 = vdwg.mxu0
    %v755 = vadd.f32 %v734, %v753
    %v756 = vxor.u32 %v755, 2147483648
    %v757 = vmul.f32 %v756, 1.442695
    %v758 = vpow.pop %v757
    %v759 = vadd.f32 %v758, 1.0
    %v760 = vrcp.pop %v759
    %v761 = vmul.f32 %v759, %v760
    %v762 = vsub.f32 1.0, %v761
    %v763 = vmul.f32 %v760, %v762
    %v764 = vadd.f32 %v760, %v763
    %vm765 = vweird.f32 %v759
    %vm766 = vweird.f32 %v760
    %vm767 = vmor %vm765, %vm766
    %v768 = vsel %vm767, %v760, %v764
    %v769 = vand.u32 2147483647, %v759
    %vm770 = vcmp.eq.f32.partialorder %v769, 8.507059e+37
    %v771 = vand.u32 %v759, 2147483648
    %v772 = vor.u32 1.1754944e-38, %v771
    %v773 = vsel %vm770, %v772, %v768
    %v774 = vmul.f32 1.0, %v773
    %v775 = vtanh.pop %v755
    %v776 = vmul.f32 %v774, %v638
    %778 = vrot.lane.b32.xlu0 %v775, 114
    %v779 = vpop.permute.xlu0 %778
    %v781 = vmul.f32 %v774, %v779
    %783 = vrot.lane.b32.xlu0 %v781, 7
    %v784 = vpop.permute.xlu0 %783
    %v786 = vadd.f32 %v776, %v784
    %v787 = vtanh.pop %v786
    %789 = vrot.lane.b32.xlu0 %v787, 14
    %v790 = vpop.permute.xlu0 %789
    %v792 = vmul.f32 %v774, %v790
    %794 = vrot.lane.b32.xlu0 %v732, 107
    %v795 = vpop.permute.xlu0 %794
    %v796 = vsel %vm131, %v795, 0
    %798 = vmatpush.msra.mxu0 0.0
    %799 = vmatpush.msra.mxu0 0.0
    %800 = vmatpush.msra.mxu0 0.0
    %801 = vmatpush.msra.mxu0 0.0
    %802 = vmatpush.msra.mxu0 0.0
    %803 = vmatpush.msra.mxu0 0.0
    %804 = vmatpush.msra.mxu0 0.0
    %805 = vmatpush.msra.mxu0 0.0
    %806 = vmatpush.msra.mxu0 0.0
    %807 = vmatpush.msra.mxu0 0.0
    %808 = vmatpush.msra.mxu0 0.0
    %809 = vmatpush.msra.mxu0 0.0
    %810 = vmatpush.msra.mxu0 0.0
    %811 = vmatpush.msra.mxu0 0.0
    %812 = vmatpush.msra.mxu0 0.0
    %813 = vmatpush.msra.mxu0 %v198
    %814 = vmatmul.f32.gmra.mxu0 %v796
    %v815 = vpop.f32.mrf.mxu0
    %v816 = vadd.f32 0.0, %v815
    %817 = vdwg.mxu0
    %819 = vrot.lane.b32.xlu0 %v792, 107
    %v820 = vpop.permute.xlu0 %819
    %v821 = vsel %vm131, %v820, 0
    %823 = vmatpush.msra.mxu0 0.0
    %824 = vmatpush.msra.mxu0 0.0
    %825 = vmatpush.msra.mxu0 0.0
    %826 = vmatpush.msra.mxu0 0.0
    %827 = vmatpush.msra.mxu0 0.0
    %828 = vmatpush.msra.mxu0 0.0
    %829 = vmatpush.msra.mxu0 0.0
    %830 = vmatpush.msra.mxu0 0.0
    %831 = vmatpush.msra.mxu0 0.0
    %832 = vmatpush.msra.mxu0 0.0
    %833 = vmatpush.msra.mxu0 0.0
    %834 = vmatpush.msra.mxu0 0.0
    %835 = vmatpush.msra.mxu0 0.0
    %836 = vmatpush.msra.mxu0 0.0
    %837 = vmatpush.msra.mxu0 0.0
    %838 = vmatpush.msra.mxu0 %v226
    %839 = vmatmul.f32.gmra.mxu0 %v821
    %v840 = vpop.f32.mrf.mxu0
    %v841 = vadd.f32 %v816, %v840
    %842 = vdwg.mxu0
    %v843 = vadd.f32 %v841, %v249
    %v844 = vxor.u32 %v843, 2147483648
    %v845 = vmul.f32 %v844, 1.442695
    %v846 = vpow.pop %v845
    %v847 = vadd.f32 %v846, 1.0
    %v848 = vrcp.pop %v847
    %v849 = vmul.f32 %v847, %v848
    %v850 = vsub.f32 1.0, %v849
    %v851 = vmul.f32 %v848, %v850
    %v852 = vadd.f32 %v848, %v851
    %vm853 = vweird.f32 %v847
    %vm854 = vweird.f32 %v848
    %vm855 = vmor %vm853, %vm854
    %v856 = vsel %vm855, %v848, %v852
    %v857 = vand.u32 2147483647, %v847
    %vm858 = vcmp.eq.f32.partialorder %v857, 8.507059e+37
    %v859 = vand.u32 %v847, 2147483648
    %v860 = vor.u32 1.1754944e-38, %v859
    %v861 = vsel %vm858, %v860, %v856
    %v862 = vmul.f32 1.0, %v861
    %v863 = vtanh.pop %v843
    %v864 = vmul.f32 %v862, %v726
    %866 = vrot.lane.b32.xlu0 %v863, 114
    %v867 = vpop.permute.xlu0 %866
    %v869 = vmul.f32 %v862, %v867
    %871 = vrot.lane.b32.xlu0 %v869, 7
    %v872 = vpop.permute.xlu0 %871
    %v874 = vadd.f32 %v864, %v872
    %v875 = vtanh.pop %v874
    %877 = vrot.lane.b32.xlu0 %v875, 14
    %v878 = vpop.permute.xlu0 %877
    %v880 = vmul.f32 %v862, %v878
    %s881 = scalar_lea.vmem [#allocation2], 40
    %v882 = vld [vmem:[%s881] sm:$0xff]
    %883 = vmatpush.msra.mxu0 0.0
    %884 = vmatpush.msra.mxu0 0.0
    %885 = vmatpush.msra.mxu0 0.0
    %886 = vmatpush.msra.mxu0 0.0
    %887 = vmatpush.msra.mxu0 0.0
    %888 = vmatpush.msra.mxu0 0.0
    %889 = vmatpush.msra.mxu0 0.0
    %890 = vmatpush.msra.mxu0 0.0
    %891 = vmatpush.msra.mxu0 0.0
    %892 = vmatpush.msra.mxu0 0.0
    %893 = vmatpush.msra.mxu0 0.0
    %894 = vmatpush.msra.mxu0 0.0
    %895 = vmatpush.msra.mxu0 0.0
    %896 = vmatpush.msra.mxu0 0.0
    %897 = vmatpush.msra.mxu0 0.0
    %898 = vmatpush.msra.mxu0 %v137
    %899 = vmatmul.f32.gmra.mxu0 %v821
    %v900 = vpop.f32.mrf.mxu0
    %v901 = vadd.f32 0.0, %v900
    %902 = vdwg.mxu0
    %v903 = vadd.f32 %v882, %v901
    %v904 = vxor.u32 %v903, 2147483648
    %v905 = vmul.f32 %v904, 1.442695
    %v906 = vpow.pop %v905
    %v907 = vadd.f32 %v906, 1.0
    %v908 = vrcp.pop %v907
    %v909 = vmul.f32 %v907, %v908
    %v910 = vsub.f32 1.0, %v909
    %v911 = vmul.f32 %v908, %v910
    %v912 = vadd.f32 %v908, %v911
    %vm913 = vweird.f32 %v907
    %vm914 = vweird.f32 %v908
    %vm915 = vmor %vm913, %vm914
    %v916 = vsel %vm915, %v908, %v912
    %v917 = vand.u32 2147483647, %v907
    %vm918 = vcmp.eq.f32.partialorder %v917, 8.507059e+37
    %v919 = vand.u32 %v907, 2147483648
    %v920 = vor.u32 1.1754944e-38, %v919
    %v921 = vsel %vm918, %v920, %v916
    %v922 = vmul.f32 1.0, %v921
    %v923 = vtanh.pop %v903
    %v924 = vmul.f32 %v922, %v786
    %926 = vrot.lane.b32.xlu0 %v923, 114
    %v927 = vpop.permute.xlu0 %926
    %v929 = vmul.f32 %v922, %v927
    %931 = vrot.lane.b32.xlu0 %v929, 7
    %v932 = vpop.permute.xlu0 %931
    %v934 = vadd.f32 %v924, %v932
    %v935 = vtanh.pop %v934
    %937 = vrot.lane.b32.xlu0 %v935, 14
    %v938 = vpop.permute.xlu0 %937
    %v940 = vmul.f32 %v922, %v938
    %942 = vrot.lane.b32.xlu0 %v880, 107
    %v943 = vpop.permute.xlu0 %942
    %v944 = vsel %vm131, %v943, 0
    %946 = vmatpush.msra.mxu0 0.0
    %947 = vmatpush.msra.mxu0 0.0
    %948 = vmatpush.msra.mxu0 0.0
    %949 = vmatpush.msra.mxu0 0.0
    %950 = vmatpush.msra.mxu0 0.0
    %951 = vmatpush.msra.mxu0 0.0
    %952 = vmatpush.msra.mxu0 0.0
    %953 = vmatpush.msra.mxu0 0.0
    %954 = vmatpush.msra.mxu0 0.0
    %955 = vmatpush.msra.mxu0 0.0
    %956 = vmatpush.msra.mxu0 0.0
    %957 = vmatpush.msra.mxu0 0.0
    %958 = vmatpush.msra.mxu0 0.0
    %959 = vmatpush.msra.mxu0 0.0
    %960 = vmatpush.msra.mxu0 0.0
    %961 = vmatpush.msra.mxu0 %v198
    %962 = vmatmul.f32.gmra.mxu0 %v944
    %v963 = vpop.f32.mrf.mxu0
    %v964 = vadd.f32 0.0, %v963
    %965 = vdwg.mxu0
    %967 = vrot.lane.b32.xlu0 %v940, 107
    %v968 = vpop.permute.xlu0 %967
    %v969 = vsel %vm131, %v968, 0
    %971 = vmatpush.msra.mxu0 0.0
    %972 = vmatpush.msra.mxu0 0.0
    %973 = vmatpush.msra.mxu0 0.0
    %974 = vmatpush.msra.mxu0 0.0
    %975 = vmatpush.msra.mxu0 0.0
    %976 = vmatpush.msra.mxu0 0.0
    %977 = vmatpush.msra.mxu0 0.0
    %978 = vmatpush.msra.mxu0 0.0
    %979 = vmatpush.msra.mxu0 0.0
    %980 = vmatpush.msra.mxu0 0.0
    %981 = vmatpush.msra.mxu0 0.0
    %982 = vmatpush.msra.mxu0 0.0
    %983 = vmatpush.msra.mxu0 0.0
    %984 = vmatpush.msra.mxu0 0.0
    %985 = vmatpush.msra.mxu0 0.0
    %986 = vmatpush.msra.mxu0 %v226
    %987 = vmatmul.f32.gmra.mxu0 %v969
    %v988 = vpop.f32.mrf.mxu0
    %v989 = vadd.f32 %v964, %v988
    %990 = vdwg.mxu0
    %v991 = vadd.f32 %v989, %v249
    %v992 = vxor.u32 %v991, 2147483648
    %v993 = vmul.f32 %v992, 1.442695
    %v994 = vpow.pop %v993
    %v995 = vadd.f32 %v994, 1.0
    %v996 = vrcp.pop %v995
    %v997 = vmul.f32 %v995, %v996
    %v998 = vsub.f32 1.0, %v997
    %v999 = vmul.f32 %v996, %v998
    %v1000 = vadd.f32 %v996, %v999
    %vm1001 = vweird.f32 %v995
    %vm1002 = vweird.f32 %v996
    %vm1003 = vmor %vm1001, %vm1002
    %v1004 = vsel %vm1003, %v996, %v1000
    %v1005 = vand.u32 2147483647, %v995
    %vm1006 = vcmp.eq.f32.partialorder %v1005, 8.507059e+37
    %v1007 = vand.u32 %v995, 2147483648
    %v1008 = vor.u32 1.1754944e-38, %v1007
    %v1009 = vsel %vm1006, %v1008, %v1004
    %v1010 = vmul.f32 1.0, %v1009
    %v1011 = vtanh.pop %v991
    %v1012 = vmul.f32 %v1010, %v874
    %1014 = vrot.lane.b32.xlu0 %v1011, 114
    %v1015 = vpop.permute.xlu0 %1014
    %v1017 = vmul.f32 %v1010, %v1015
    %1019 = vrot.lane.b32.xlu0 %v1017, 7
    %v1020 = vpop.permute.xlu0 %1019
    %v1022 = vadd.f32 %v1012, %v1020
    %v1023 = vtanh.pop %v1022
    %1025 = vrot.lane.b32.xlu0 %v1023, 14
    %v1026 = vpop.permute.xlu0 %1025
    %v1028 = vmul.f32 %v1010, %v1026
    %s1029 = scalar_lea.vmem [#allocation2], 48
    %v1030 = vld [vmem:[%s1029] sm:$0xff]
    %1031 = vmatpush.msra.mxu0 0.0
    %1032 = vmatpush.msra.mxu0 0.0
    %1033 = vmatpush.msra.mxu0 0.0
    %1034 = vmatpush.msra.mxu0 0.0
    %1035 = vmatpush.msra.mxu0 0.0
    %1036 = vmatpush.msra.mxu0 0.0
    %1037 = vmatpush.msra.mxu0 0.0
    %1038 = vmatpush.msra.mxu0 0.0
    %1039 = vmatpush.msra.mxu0 0.0
    %1040 = vmatpush.msra.mxu0 0.0
    %1041 = vmatpush.msra.mxu0 0.0
    %1042 = vmatpush.msra.mxu0 0.0
    %1043 = vmatpush.msra.mxu0 0.0
    %1044 = vmatpush.msra.mxu0 0.0
    %1045 = vmatpush.msra.mxu0 0.0
    %1046 = vmatpush.msra.mxu0 %v137
    %1047 = vmatmul.f32.gmra.mxu0 %v969
    %v1048 = vpop.f32.mrf.mxu0
    %v1049 = vadd.f32 0.0, %v1048
    %1050 = vdwg.mxu0
    %v1051 = vadd.f32 %v1030, %v1049
    %v1052 = vxor.u32 %v1051, 2147483648
    %v1053 = vmul.f32 %v1052, 1.442695
    %v1054 = vpow.pop %v1053
    %v1055 = vadd.f32 %v1054, 1.0
    %v1056 = vrcp.pop %v1055
    %v1057 = vmul.f32 %v1055, %v1056
    %v1058 = vsub.f32 1.0, %v1057
    %v1059 = vmul.f32 %v1056, %v1058
    %v1060 = vadd.f32 %v1056, %v1059
    %vm1061 = vweird.f32 %v1055
    %vm1062 = vweird.f32 %v1056
    %vm1063 = vmor %vm1061, %vm1062
    %v1064 = vsel %vm1063, %v1056, %v1060
    %v1065 = vand.u32 2147483647, %v1055
    %vm1066 = vcmp.eq.f32.partialorder %v1065, 8.507059e+37
    %v1067 = vand.u32 %v1055, 2147483648
    %v1068 = vor.u32 1.1754944e-38, %v1067
    %v1069 = vsel %vm1066, %v1068, %v1064
    %v1070 = vmul.f32 1.0, %v1069
    %v1071 = vtanh.pop %v1051
    %v1072 = vmul.f32 %v1070, %v934
    %1074 = vrot.lane.b32.xlu0 %v1071, 114
    %v1075 = vpop.permute.xlu0 %1074
    %v1077 = vmul.f32 %v1070, %v1075
    %1079 = vrot.lane.b32.xlu0 %v1077, 7
    %v1080 = vpop.permute.xlu0 %1079
    %v1082 = vadd.f32 %v1072, %v1080
    %v1083 = vtanh.pop %v1082
    %1085 = vrot.lane.b32.xlu0 %v1083, 14
    %v1086 = vpop.permute.xlu0 %1085
    %v1088 = vmul.f32 %v1070, %v1086
    %1090 = vrot.lane.b32.xlu0 %v1028, 107
    %v1091 = vpop.permute.xlu0 %1090
    %v1092 = vsel %vm131, %v1091, 0
    %1094 = vmatpush.msra.mxu0 0.0
    %1095 = vmatpush.msra.mxu0 0.0
    %1096 = vmatpush.msra.mxu0 0.0
    %1097 = vmatpush.msra.mxu0 0.0
    %1098 = vmatpush.msra.mxu0 0.0
    %1099 = vmatpush.msra.mxu0 0.0
    %1100 = vmatpush.msra.mxu0 0.0
    %1101 = vmatpush.msra.mxu0 0.0
    %1102 = vmatpush.msra.mxu0 0.0
    %1103 = vmatpush.msra.mxu0 0.0
    %1104 = vmatpush.msra.mxu0 0.0
    %1105 = vmatpush.msra.mxu0 0.0
    %1106 = vmatpush.msra.mxu0 0.0
    %1107 = vmatpush.msra.mxu0 0.0
    %1108 = vmatpush.msra.mxu0 0.0
    %1109 = vmatpush.msra.mxu0 %v198
    %1110 = vmatmul.f32.gmra.mxu0 %v1092
    %v1111 = vpop.f32.mrf.mxu0
    %v1112 = vadd.f32 0.0, %v1111
    %1113 = vdwg.mxu0
    %1115 = vrot.lane.b32.xlu0 %v1088, 107
    %v1116 = vpop.permute.xlu0 %1115
    %v1117 = vsel %vm131, %v1116, 0
    %1119 = vmatpush.msra.mxu0 0.0
    %1120 = vmatpush.msra.mxu0 0.0
    %1121 = vmatpush.msra.mxu0 0.0
    %1122 = vmatpush.msra.mxu0 0.0
    %1123 = vmatpush.msra.mxu0 0.0
    %1124 = vmatpush.msra.mxu0 0.0
    %1125 = vmatpush.msra.mxu0 0.0
    %1126 = vmatpush.msra.mxu0 0.0
    %1127 = vmatpush.msra.mxu0 0.0
    %1128 = vmatpush.msra.mxu0 0.0
    %1129 = vmatpush.msra.mxu0 0.0
    %1130 = vmatpush.msra.mxu0 0.0
    %1131 = vmatpush.msra.mxu0 0.0
    %1132 = vmatpush.msra.mxu0 0.0
    %1133 = vmatpush.msra.mxu0 0.0
    %1134 = vmatpush.msra.mxu0 %v226
    %1135 = vmatmul.f32.gmra.mxu0 %v1117
    %v1136 = vpop.f32.mrf.mxu0
    %v1137 = vadd.f32 %v1112, %v1136
    %1138 = vdwg.mxu0
    %v1139 = vadd.f32 %v1137, %v249
    %v1140 = vxor.u32 %v1139, 2147483648
    %v1141 = vmul.f32 %v1140, 1.442695
    %v1142 = vpow.pop %v1141
    %v1143 = vadd.f32 %v1142, 1.0
    %v1144 = vrcp.pop %v1143
    %v1145 = vmul.f32 %v1143, %v1144
    %v1146 = vsub.f32 1.0, %v1145
    %v1147 = vmul.f32 %v1144, %v1146
    %v1148 = vadd.f32 %v1144, %v1147
    %vm1149 = vweird.f32 %v1143
    %vm1150 = vweird.f32 %v1144
    %vm1151 = vmor %vm1149, %vm1150
    %v1152 = vsel %vm1151, %v1144, %v1148
    %v1153 = vand.u32 2147483647, %v1143
    %vm1154 = vcmp.eq.f32.partialorder %v1153, 8.507059e+37
    %v1155 = vand.u32 %v1143, 2147483648
    %v1156 = vor.u32 1.1754944e-38, %v1155
    %v1157 = vsel %vm1154, %v1156, %v1152
    %v1158 = vmul.f32 1.0, %v1157
    %v1159 = vtanh.pop %v1139
    %v1160 = vmul.f32 %v1158, %v1022
    %1162 = vrot.lane.b32.xlu0 %v1159, 114
    %v1163 = vpop.permute.xlu0 %1162
    %v1165 = vmul.f32 %v1158, %v1163
    %1167 = vrot.lane.b32.xlu0 %v1165, 7
    %v1168 = vpop.permute.xlu0 %1167
    %v1170 = vadd.f32 %v1160, %v1168
    %v1171 = vtanh.pop %v1170
    %1173 = vrot.lane.b32.xlu0 %v1171, 14
    %v1174 = vpop.permute.xlu0 %1173
    %v1176 = vmul.f32 %v1158, %v1174
    %s1177 = scalar_lea.vmem [#allocation2], 56
    %v1178 = vld [vmem:[%s1177] sm:$0xff]
    %1179 = vmatpush.msra.mxu0 0.0
    %1180 = vmatpush.msra.mxu0 0.0
    %1181 = vmatpush.msra.mxu0 0.0
    %1182 = vmatpush.msra.mxu0 0.0
    %1183 = vmatpush.msra.mxu0 0.0
    %1184 = vmatpush.msra.mxu0 0.0
    %1185 = vmatpush.msra.mxu0 0.0
    %1186 = vmatpush.msra.mxu0 0.0
    %1187 = vmatpush.msra.mxu0 0.0
    %1188 = vmatpush.msra.mxu0 0.0
    %1189 = vmatpush.msra.mxu0 0.0
    %1190 = vmatpush.msra.mxu0 0.0
    %1191 = vmatpush.msra.mxu0 0.0
    %1192 = vmatpush.msra.mxu0 0.0
    %1193 = vmatpush.msra.mxu0 0.0
    %1194 = vmatpush.msra.mxu0 %v137
    %1195 = vmatmul.f32.gmra.mxu0 %v1117
    %v1196 = vpop.f32.mrf.mxu0
    %v1197 = vadd.f32 0.0, %v1196
    %1198 = vdwg.mxu0
    %v1199 = vadd.f32 %v1178, %v1197
    %v1200 = vxor.u32 %v1199, 2147483648
    %v1201 = vmul.f32 %v1200, 1.442695
    %v1202 = vpow.pop %v1201
    %v1203 = vadd.f32 %v1202, 1.0
    %v1204 = vrcp.pop %v1203
    %v1205 = vmul.f32 %v1203, %v1204
    %v1206 = vsub.f32 1.0, %v1205
    %v1207 = vmul.f32 %v1204, %v1206
    %v1208 = vadd.f32 %v1204, %v1207
    %vm1209 = vweird.f32 %v1203
    %vm1210 = vweird.f32 %v1204
    %vm1211 = vmor %vm1209, %vm1210
    %v1212 = vsel %vm1211, %v1204, %v1208
    %v1213 = vand.u32 2147483647, %v1203
    %vm1214 = vcmp.eq.f32.partialorder %v1213, 8.507059e+37
    %v1215 = vand.u32 %v1203, 2147483648
    %v1216 = vor.u32 1.1754944e-38, %v1215
    %v1217 = vsel %vm1214, %v1216, %v1212
    %v1218 = vmul.f32 1.0, %v1217
    %v1219 = vtanh.pop %v1199
    %v1220 = vmul.f32 %v1218, %v1082
    %1222 = vrot.lane.b32.xlu0 %v1219, 114
    %v1223 = vpop.permute.xlu0 %1222
    %v1225 = vmul.f32 %v1218, %v1223
    %1227 = vrot.lane.b32.xlu0 %v1225, 7
    %v1228 = vpop.permute.xlu0 %1227
    %v1230 = vadd.f32 %v1220, %v1228
    %v1231 = vtanh.pop %v1230
    %1233 = vrot.lane.b32.xlu0 %v1231, 14
    %v1234 = vpop.permute.xlu0 %1233
    %v1236 = vmul.f32 %v1218, %v1234
    %1238 = vrot.lane.b32.xlu0 %v1176, 107
    %v1239 = vpop.permute.xlu0 %1238
    %v1240 = vsel %vm131, %v1239, 0
    %1242 = vmatpush.msra.mxu0 0.0
    %1243 = vmatpush.msra.mxu0 0.0
    %1244 = vmatpush.msra.mxu0 0.0
    %1245 = vmatpush.msra.mxu0 0.0
    %1246 = vmatpush.msra.mxu0 0.0
    %1247 = vmatpush.msra.mxu0 0.0
    %1248 = vmatpush.msra.mxu0 0.0
    %1249 = vmatpush.msra.mxu0 0.0
    %1250 = vmatpush.msra.mxu0 0.0
    %1251 = vmatpush.msra.mxu0 0.0
    %1252 = vmatpush.msra.mxu0 0.0
    %1253 = vmatpush.msra.mxu0 0.0
    %1254 = vmatpush.msra.mxu0 0.0
    %1255 = vmatpush.msra.mxu0 0.0
    %1256 = vmatpush.msra.mxu0 0.0
    %1257 = vmatpush.msra.mxu0 %v198
    %1258 = vmatmul.f32.gmra.mxu0 %v1240
    %v1259 = vpop.f32.mrf.mxu0
    %v1260 = vadd.f32 0.0, %v1259
    %1261 = vdwg.mxu0
    %1263 = vrot.lane.b32.xlu0 %v1236, 107
    %v1264 = vpop.permute.xlu0 %1263
    %v1265 = vsel %vm131, %v1264, 0
    %1267 = vmatpush.msra.mxu0 0.0
    %1268 = vmatpush.msra.mxu0 0.0
    %1269 = vmatpush.msra.mxu0 0.0
    %1270 = vmatpush.msra.mxu0 0.0
    %1271 = vmatpush.msra.mxu0 0.0
    %1272 = vmatpush.msra.mxu0 0.0
    %1273 = vmatpush.msra.mxu0 0.0
    %1274 = vmatpush.msra.mxu0 0.0
    %1275 = vmatpush.msra.mxu0 0.0
    %1276 = vmatpush.msra.mxu0 0.0
    %1277 = vmatpush.msra.mxu0 0.0
    %1278 = vmatpush.msra.mxu0 0.0
    %1279 = vmatpush.msra.mxu0 0.0
    %1280 = vmatpush.msra.mxu0 0.0
    %1281 = vmatpush.msra.mxu0 0.0
    %1282 = vmatpush.msra.mxu0 %v226
    %1283 = vmatmul.f32.gmra.mxu0 %v1265
    %v1284 = vpop.f32.mrf.mxu0
    %v1285 = vadd.f32 %v1260, %v1284
    %1286 = vdwg.mxu0
    %v1287 = vadd.f32 %v1285, %v249
    %v1288 = vxor.u32 %v1287, 2147483648
    %v1289 = vmul.f32 %v1288, 1.442695
    %v1290 = vpow.pop %v1289
    %v1291 = vadd.f32 %v1290, 1.0
    %v1292 = vrcp.pop %v1291
    %v1293 = vmul.f32 %v1291, %v1292
    %v1294 = vsub.f32 1.0, %v1293
    %v1295 = vmul.f32 %v1292, %v1294
    %v1296 = vadd.f32 %v1292, %v1295
    %vm1297 = vweird.f32 %v1291
    %vm1298 = vweird.f32 %v1292
    %vm1299 = vmor %vm1297, %vm1298
    %v1300 = vsel %vm1299, %v1292, %v1296
    %v1301 = vand.u32 2147483647, %v1291
    %vm1302 = vcmp.eq.f32.partialorder %v1301, 8.507059e+37
    %v1303 = vand.u32 %v1291, 2147483648
    %v1304 = vor.u32 1.1754944e-38, %v1303
    %v1305 = vsel %vm1302, %v1304, %v1300
    %v1306 = vmul.f32 1.0, %v1305
    %v1307 = vtanh.pop %v1287
    %v1308 = vmul.f32 %v1306, %v1170
    %1310 = vrot.lane.b32.xlu0 %v1307, 114
    %v1311 = vpop.permute.xlu0 %1310
    %v1313 = vmul.f32 %v1306, %v1311
    %1315 = vrot.lane.b32.xlu0 %v1313, 7
    %v1316 = vpop.permute.xlu0 %1315
    %v1318 = vadd.f32 %v1308, %v1316
    %v1319 = vtanh.pop %v1318
    %1321 = vrot.lane.b32.xlu0 %v1319, 14
    %v1322 = vpop.permute.xlu0 %1321
    %v1324 = vmul.f32 %v1306, %v1322
    %1326 = vrot.lane.b32.xlu0 %v1324, 107
    %v1327 = vpop.permute.xlu0 %1326
    %1329 = vst.msk [vmem:[#allocation3] sm:$0xff] %vm131, %v1327
    // Predicated region
    $region30: #{tpu_custom_call.1} parent=1 // pred_check
      _
    $region31: #{tpu_custom_call.1} parent=1 // pred_check_branch
      %1331 = sbr.rel (0) target = $region33
    $region32: #{tpu_custom_call.1} parent=1 // pred_region
      %1333 = vsyncadd [#allocation4], 0
      %s1335 = sshll.u32 [#allocation3], 4
      %s1336 = int_to_ptr.vmem [resolvable:$true] %s1335
      %s1337 = sshll.u32 %s7, 4
      %s1338 = int_to_ptr.hbm [resolvable:$true] %s1337
      %1340 = dma.vmem_to_hbm [thread:$0]  %s1336, 128, %s1338, [#allocation4]
    $region33: #{tpu_custom_call.1} parent=1 // pred_fallthru
      _
    // Predicated region
    $region34: #{tpu_custom_call.1} parent=1 // pred_check
      _
    $region35: #{tpu_custom_call.1} parent=1 // pred_check_branch
      %1342 = sbr.rel (0) target = $region37
    $region36: #{tpu_custom_call.1} parent=1 // pred_region
      %1344 = dma.done [#allocation4], 128
    $region37: #{tpu_custom_call.1} parent=1 // pred_fallthru
      _
    %1345 = vsyncpa [#allocation4], 1

</llo_original>
